<compile_context>
chip_gen: v7x
topology: tpu7x:2x2x1
jax: 0.10.0
libtpu: 0.0.40
codegen_flags: <defaults>
</compile_context>

<pallas_src>
import numpy as np
import jax
import jax.numpy as jnp
from jax.experimental import pallas as pl
from jax.experimental.pallas import tpu as pltpu


# ---------------------------------------------------------------------------
# Gaussian taps / banded downsampling matrices (match FOMM exactly)
# ---------------------------------------------------------------------------

def _gaussian_taps(scale):
    """Normalized 1-D Gaussian taps, pad amount and decimation stride."""
    sigma = (1.0 / scale - 1.0) / 2.0
    ksize = 2 * round(sigma * 4) + 1          # Python round == reference impl
    ka = ksize // 2                           # ksize is odd -> kb == ka
    stride = int(1.0 / scale)
    ax = np.arange(ksize, dtype=np.float64)
    mean = (ksize - 1) / 2.0
    g = np.exp(-((ax - mean) ** 2) / (2.0 * sigma ** 2))
    g = g / g.sum()                           # outer(g,g) == PyTorch 2-D kernel
    return g, ka, stride


def _band_matrices(scale, H, W):
    """V (Ho,H), Hm (W,Wo) such that V @ X @ Hm == pad+blur+::stride of X."""
    g, ka, stride = _gaussian_taps(scale)
    ks = g.shape[0]
    Ho = -(-H // stride)
    Wo = -(-W // stride)
    V = np.zeros((Ho, H), np.float64)
    for o in range(Ho):
        for d in range(ks):
            y = o * stride + d - ka
            if 0 <= y < H:                    # zero padding -> clipped taps
                V[o, y] += g[d]
    Hm = np.zeros((W, Wo), np.float64)
    for o in range(Wo):
        for d in range(ks):
            xc = o * stride + d - ka
            if 0 <= xc < W:
                Hm[xc, o] += g[d]
    return V.astype(np.float32), Hm.astype(np.float32), Ho, Wo


# ---------------------------------------------------------------------------
# Pallas kernel: all pyramid levels for a block of P image planes
# ---------------------------------------------------------------------------

def _make_pyramid_kernel(num_scales):
    def kernel(*refs):
        x_ref = refs[0]
        mat_refs = refs[1:1 + 2 * num_scales]
        out_refs = refs[1 + 2 * num_scales:]

        x = x_ref[...].astype(jnp.float32)                       # (P, H, W)
        P = x.shape[0]
        for s in range(num_scales):
            V = mat_refs[2 * s][...]                             # (Ho, H)
            Hm = mat_refs[2 * s + 1][...]                        # (W, Wo)
            # Vertical blur + row decimation (sublane axis): batched MXU matmul.
            Vb = jnp.broadcast_to(V[None], (P,) + V.shape)
            t = jnp.einsum('poh,phw->pow', Vb, x,
                           preferred_element_type=jnp.float32)   # (P, Ho, W)
            # Horizontal blur + column decimation (lane axis): batched MXU matmul.
            Hb = jnp.broadcast_to(Hm[None], (P,) + Hm.shape)
            y = jnp.einsum('pow,pwq->poq', t, Hb,
                           preferred_element_type=jnp.float32)   # (P, Ho, Wo)
            out_refs[s][...] = y.astype(out_refs[s].dtype)
    return kernel


def _choose_plane_block(n_planes, h, w, out_hw, budget_bytes=8 << 20):
    """Largest divisor of n_planes fitting a conservative per-block VMEM budget."""
    per_plane = 4 * h * w * 3                      # in block (dbl-buf) + f32 copy
    for ho, wo in out_hw:
        per_plane += 4 * (ho * w + 3 * ho * wo)    # intermediate + dbl-buf out
    pmax = max(1, budget_bytes // max(per_plane, 1))
    pmax = int(min(pmax, 32, n_planes))
    for p in range(pmax, 0, -1):
        if n_planes % p == 0:
            return p
    return 1


def anti_alias_pyramid(x, scales):
    """{scale: downsampled image} for every scale; one pallas_call for all != 1."""
    B, C, H, W = x.shape
    N = B * C

    results = {}
    uniq = []
    for s in scales:
        if float(s) == 1.0:
            results[s] = x                         # identity level
        elif s not in uniq:
            uniq.append(s)
    if not uniq:
        return results

    mats = [_band_matrices(float(s), H, W) for s in uniq]
    out_hw = [(Ho, Wo) for (_, _, Ho, Wo) in mats]
    P = _choose_plane_block(N, H, W, out_hw)
    grid = (N // P,)

    x_planes = x.reshape(N, H, W)

    in_specs = [pl.BlockSpec((P, H, W), lambda i: (i, 0, 0))]
    args = [x_planes]
    for V, Hm, _, _ in mats:
        in_specs.append(pl.BlockSpec(V.shape, lambda i: (0, 0)))
        in_specs.append(pl.BlockSpec(Hm.shape, lambda i: (0, 0)))
        args.append(jnp.asarray(V))
        args.append(jnp.asarray(Hm))

    out_shapes = tuple(jax.ShapeDtypeStruct((N, Ho, Wo), x.dtype)
                       for (_, _, Ho, Wo) in mats)
    out_specs = [pl.BlockSpec((P, Ho, Wo), lambda i: (i, 0, 0))
                 for (_, _, Ho, Wo) in mats]

    outs = pl.pallas_call(
        _make_pyramid_kernel(len(uniq)),
        out_shape=out_shapes,
        grid_spec=pltpu.PrefetchScalarGridSpec(
            num_scalar_prefetch=0,
            grid=grid,
            in_specs=in_specs,
            out_specs=out_specs),
        compiler_params=pltpu.CompilerParams(
            dimension_semantics=("parallel",),
            vmem_limit_bytes=32 * 1024 * 1024),
    )(*args)

    for s, (_, _, Ho, Wo), y in zip(uniq, mats, outs):
        results[s] = y.reshape(B, C, Ho, Wo)
    return results


class ImagePyramide:
    """JAX/Pallas port of ImagePyramide: dict of anti-aliased downsampled images."""

    def __init__(self, scales, num_channels):
        # num_channels only replicates the depthwise weight per channel in
        # PyTorch; the Gaussian is identical for every channel, so unused here.
        self.scales = list(scales)
        self.num_channels = num_channels

    def __call__(self, x):
        per_scale = anti_alias_pyramid(x, self.scales)
        out_dict = {}
        for scale in self.scales:
            key = str(scale).replace('.', '-')
            out_dict['prediction_' + key.replace('-', '.')] = per_scale[scale]
        return out_dict


# ---------------------------------------------------------------------------
# Pure-JAX reference (dense pad + 2-D conv + strided slice) for validation
# ---------------------------------------------------------------------------

def _reference_downsample(x, scale):
    if float(scale) == 1.0:
        return x
    g, ka, stride = _gaussian_taps(float(scale))
    ks = g.shape[0]
    k2 = np.outer(g, g)                            # already sums to 1
    B, C, H, W = x.shape
    xp = jnp.pad(x.astype(jnp.float32), ((0, 0), (0, 0), (ka, ka), (ka, ka)))
    acc = jnp.zeros((B, C, H, W), jnp.float32)
    for dy in range(ks):
        for dx in range(ks):
            acc = acc + float(k2[dy, dx]) * xp[:, :, dy:dy + H, dx:dx + W]
    return acc[:, :, ::stride, ::stride].astype(x.dtype)


if __name__ == "__main__":
    key = jax.random.PRNGKey(0)
    B, C, H, W = 2, 4, 16, 16
    x = jax.random.normal(key, (B, C, H, W), dtype=jnp.float32)

    scales = [1, 0.5, 0.25]
    pyramid = ImagePyramide(scales, num_channels=C)

    out = pyramid(x)
    out = jax.tree_util.tree_map(jax.block_until_ready, out)

    # Shape / identity sanity checks (PyTorch semantics).
    assert out['prediction_1'].shape == (B, C, H, W)
    assert out['prediction_0.5'].shape == (B, C, H // 2, W // 2)
    assert out['prediction_0.25'].shape == (B, C, H // 4, W // 4)
    assert jnp.allclose(out['prediction_1'], x)

    # Numerical check vs. dense pad+conv+slice reference (loose tolerance to
    # absorb MXU bf16-pass rounding of the f32 matmuls).
    for s, name in [(0.5, 'prediction_0.5'), (0.25, 'prediction_0.25')]:
        ref = _reference_downsample(x, s)
        err = float(jnp.max(jnp.abs(out[name].astype(jnp.float32)
                                    - ref.astype(jnp.float32))))
        assert err < 5e-2, f"scale {s}: max abs err {err}"

    print("KERNEL_OK")
</pallas_src>

<mosaic_0001>
module attributes {stable_mosaic.version = 11 : i64} {
  func.func @kernel(%arg0: i32, %arg1: memref<8x16x16xf32, #tpu.memory_space<vmem>>, %arg2: memref<8x16xf32, #tpu.memory_space<vmem>>, %arg3: memref<16x8xf32, #tpu.memory_space<vmem>>, %arg4: memref<4x16xf32, #tpu.memory_space<vmem>>, %arg5: memref<16x4xf32, #tpu.memory_space<vmem>>, %arg6: memref<8x8x8xf32, #tpu.memory_space<vmem>>, %arg7: memref<8x4x4xf32, #tpu.memory_space<vmem>>) attributes {dimension_semantics = [#tpu.dimension_semantics<parallel>], iteration_bounds = array<i64: 1>, scalar_prefetch = 0 : i64, scratch_operands = 0 : i64, tpu.core_type = #tpu.core_type<tc>, window_params = [{transform_indices = @transform_0, window_bounds = array<i64: 8, 16, 16>}, {pipeline_mode = #tpu.pipeline_mode<synchronous>, transform_indices = @transform_1, window_bounds = array<i64: 8, 16>}, {pipeline_mode = #tpu.pipeline_mode<synchronous>, transform_indices = @transform_2, window_bounds = array<i64: 16, 8>}, {pipeline_mode = #tpu.pipeline_mode<synchronous>, transform_indices = @transform_3, window_bounds = array<i64: 4, 16>}, {pipeline_mode = #tpu.pipeline_mode<synchronous>, transform_indices = @transform_4, window_bounds = array<i64: 16, 4>}, {transform_indices = @transform_5, window_bounds = array<i64: 8, 8, 8>}, {transform_indices = @transform_6, window_bounds = array<i64: 8, 4, 4>}]} {
    %c0 = arith.constant 0 : index
    %c0_0 = arith.constant 0 : index
    %c0_1 = arith.constant 0 : index
    %0 = vector.load %arg1[%c0, %c0_0, %c0_1] : memref<8x16x16xf32, #tpu.memory_space<vmem>>, vector<8x16x16xf32>
    %c0_2 = arith.constant 0 : index
    %c0_3 = arith.constant 0 : index
    %1 = vector.load %arg2[%c0_2, %c0_3] : memref<8x16xf32, #tpu.memory_space<vmem>>, vector<8x16xf32>
    %c0_4 = arith.constant 0 : index
    %c0_5 = arith.constant 0 : index
    %2 = vector.load %arg3[%c0_4, %c0_5] : memref<16x8xf32, #tpu.memory_space<vmem>>, vector<16x8xf32>
    %3 = vector.shape_cast %1 : vector<8x16xf32> to vector<1x8x16xf32>
    %4 = vector.shape_cast %3 : vector<1x8x16xf32> to vector<1x8x16xf32>
    %5 = vector.broadcast %4 : vector<1x8x16xf32> to vector<8x8x16xf32>
    "tpu.trace_start"() <{level = 10 : i32, message = "poh,phw->pow"}> : () -> ()
    %cst = arith.constant dense<0.000000e+00> : vector<8x8x16xf32>
    %6 = tpu.matmul %5, %0, %cst {dimension_numbers = #tpu.dot_dimension_numbers<[2], [1], [1], [2], [0, 0, 0, 1, 1, 2], [0], [0]>} : vector<8x8x16xf32>, vector<8x16x16xf32>, vector<8x8x16xf32> -> vector<8x8x16xf32>
    "tpu.trace_stop"() : () -> ()
    %7 = vector.shape_cast %2 : vector<16x8xf32> to vector<1x16x8xf32>
    %8 = vector.shape_cast %7 : vector<1x16x8xf32> to vector<1x16x8xf32>
    %9 = vector.broadcast %8 : vector<1x16x8xf32> to vector<8x16x8xf32>
    "tpu.trace_start"() <{level = 10 : i32, message = "pow,pwq->poq"}> : () -> ()
    %cst_6 = arith.constant dense<0.000000e+00> : vector<8x8x8xf32>
    %10 = tpu.matmul %6, %9, %cst_6 {dimension_numbers = #tpu.dot_dimension_numbers<[2], [1], [1], [2], [0, 0, 0, 1, 1, 2], [0], [0]>} : vector<8x8x16xf32>, vector<8x16x8xf32>, vector<8x8x8xf32> -> vector<8x8x8xf32>
    "tpu.trace_stop"() : () -> ()
    %c0_7 = arith.constant 0 : index
    %c0_8 = arith.constant 0 : index
    %c0_9 = arith.constant 0 : index
    %11 = vector.load %arg6[%c0_7, %c0_8, %c0_9] : memref<8x8x8xf32, #tpu.memory_space<vmem>>, vector<8x8x8xf32>
    tpu.vector_store %arg6[%c0_7, %c0_8, %c0_9], %10 {strides = array<i32>} : memref<8x8x8xf32, #tpu.memory_space<vmem>>, vector<8x8x8xf32>,
    %c0_10 = arith.constant 0 : index
    %c0_11 = arith.constant 0 : index
    %12 = vector.load %arg4[%c0_10, %c0_11] : memref<4x16xf32, #tpu.memory_space<vmem>>, vector<4x16xf32>
    %c0_12 = arith.constant 0 : index
    %c0_13 = arith.constant 0 : index
    %13 = vector.load %arg5[%c0_12, %c0_13] : memref<16x4xf32, #tpu.memory_space<vmem>>, vector<16x4xf32>
    %14 = vector.shape_cast %12 : vector<4x16xf32> to vector<1x4x16xf32>
    %15 = vector.shape_cast %14 : vector<1x4x16xf32> to vector<1x4x16xf32>
    %16 = vector.broadcast %15 : vector<1x4x16xf32> to vector<8x4x16xf32>
    "tpu.trace_start"() <{level = 10 : i32, message = "poh,phw->pow"}> : () -> ()
    %cst_14 = arith.constant dense<0.000000e+00> : vector<8x4x16xf32>
    %17 = tpu.matmul %16, %0, %cst_14 {dimension_numbers = #tpu.dot_dimension_numbers<[2], [1], [1], [2], [0, 0, 0, 1, 1, 2], [0], [0]>} : vector<8x4x16xf32>, vector<8x16x16xf32>, vector<8x4x16xf32> -> vector<8x4x16xf32>
    "tpu.trace_stop"() : () -> ()
    %18 = vector.shape_cast %13 : vector<16x4xf32> to vector<1x16x4xf32>
    %19 = vector.shape_cast %18 : vector<1x16x4xf32> to vector<1x16x4xf32>
    %20 = vector.broadcast %19 : vector<1x16x4xf32> to vector<8x16x4xf32>
    "tpu.trace_start"() <{level = 10 : i32, message = "pow,pwq->poq"}> : () -> ()
    %cst_15 = arith.constant dense<0.000000e+00> : vector<8x4x4xf32>
    %21 = tpu.matmul %17, %20, %cst_15 {dimension_numbers = #tpu.dot_dimension_numbers<[2], [1], [1], [2], [0, 0, 0, 1, 1, 2], [0], [0]>} : vector<8x4x16xf32>, vector<8x16x4xf32>, vector<8x4x4xf32> -> vector<8x4x4xf32>
    "tpu.trace_stop"() : () -> ()
    %c0_16 = arith.constant 0 : index
    %c0_17 = arith.constant 0 : index
    %c0_18 = arith.constant 0 : index
    %22 = vector.load %arg7[%c0_16, %c0_17, %c0_18] : memref<8x4x4xf32, #tpu.memory_space<vmem>>, vector<8x4x4xf32>
    tpu.vector_store %arg7[%c0_16, %c0_17, %c0_18], %21 {strides = array<i32>} : memref<8x4x4xf32, #tpu.memory_space<vmem>>, vector<8x4x4xf32>,
    return
  }
  func.func @transform_0(%arg0: i32) -> (i32, i32, i32) {
    %c0_i32 = arith.constant 0 : i32
    %c0_i32_0 = arith.constant 0 : i32
    %c0_i32_1 = arith.constant 0 : i32
    return %arg0, %c0_i32, %c0_i32_0 : i32, i32, i32
  }
  func.func @transform_1(%arg0: i32) -> (i32, i32) {
    %c0_i32 = arith.constant 0 : i32
    %c0_i32_0 = arith.constant 0 : i32
    %c0_i32_1 = arith.constant 0 : i32
    return %c0_i32, %c0_i32_0 : i32, i32
  }
  func.func @transform_2(%arg0: i32) -> (i32, i32) {
    %c0_i32 = arith.constant 0 : i32
    %c0_i32_0 = arith.constant 0 : i32
    %c0_i32_1 = arith.constant 0 : i32
    return %c0_i32, %c0_i32_0 : i32, i32
  }
  func.func @transform_3(%arg0: i32) -> (i32, i32) {
    %c0_i32 = arith.constant 0 : i32
    %c0_i32_0 = arith.constant 0 : i32
    %c0_i32_1 = arith.constant 0 : i32
    return %c0_i32, %c0_i32_0 : i32, i32
  }
  func.func @transform_4(%arg0: i32) -> (i32, i32) {
    %c0_i32 = arith.constant 0 : i32
    %c0_i32_0 = arith.constant 0 : i32
    %c0_i32_1 = arith.constant 0 : i32
    return %c0_i32, %c0_i32_0 : i32, i32
  }
  func.func @transform_5(%arg0: i32) -> (i32, i32, i32) {
    %c0_i32 = arith.constant 0 : i32
    %c0_i32_0 = arith.constant 0 : i32
    %c0_i32_1 = arith.constant 0 : i32
    return %arg0, %c0_i32, %c0_i32_0 : i32, i32, i32
  }
  func.func @transform_6(%arg0: i32) -> (i32, i32, i32) {
    %c0_i32 = arith.constant 0 : i32
    %c0_i32_0 = arith.constant 0 : i32
    %c0_i32_1 = arith.constant 0 : i32
    return %arg0, %c0_i32, %c0_i32_0 : i32, i32, i32
  }
}

</mosaic_0001>

<llo_original>
// kernel: tpu_custom_call.1
$region0: #{tpu_custom_call.1}
  #allocation0 [shape = 'u32[]', space=smem, size = 0x4, offset = 0x4, fixed_abs, tag = 'smem constant byte address 0x4 - core index']
  #allocation1 [shape = 'u32[144,128]{1,0:T(1,128)}', space=vmem, size = 0x12000, scoped, tag = 'internal scratch']
  %s0 = inlined_call_operand.hbm [shape: f32[8,16,16], index: 0, kind: input, shape index: {}]
  %s1 = inlined_call_operand.vmem [shape: f32[8,16], index: 1, kind: input, shape index: {}]
  %s2 = inlined_call_operand.vmem [shape: f32[16,8], index: 2, kind: input, shape index: {}]
  %s3 = inlined_call_operand.vmem [shape: f32[4,16], index: 3, kind: input, shape index: {}]
  %s4 = inlined_call_operand.vmem [shape: f32[16,4], index: 4, kind: input, shape index: {}]
  %s5 = inlined_call_operand.hbm [shape: f32[8,8,8], index: 5, kind: output, shape index: {0}]
  %s6 = inlined_call_operand.vmem [shape: f32[8,4,4], index: 6, kind: output, shape index: {1}]
  %7 = xla_tuple %s5, %s6
  %s8 = sld [smem:[#allocation0]]
  $region42: #{tpu_custom_call.1} parent=0
    _
  %s10 = ssub.s32 1, %s8
  %s11 = scalar_select 0, %s10, %s8
  $region1: #{tpu_custom_call.1} parent=0
    #allocation2 [shape = 'u8[65536]{0}', space=vmem, size = 0x10000, scoped, tag = 'input window, operand 0, single buffered']
    #allocation3 [shape = 's32[1]{0}', space=sflag, size = 0x4, scoped, tag = 'scoped memory for tpu_custom_call.1']
    #allocation4 [shape = 's32[1]{0}', space=sflag, size = 0x4, scoped, tag = 'scoped memory for tpu_custom_call.1']
    #allocation5 [shape = 'u8[32768]{0}', space=vmem, size = 0x8000, scoped, tag = 'output window, operand 0, single buffered']
    %12 = vsyncpa [#allocation3], 0
    %13 = vsyncpa [#allocation4], 0
    // Predicated region
    $region2: #{tpu_custom_call.1} parent=1 // pred_check
      _
    $region3: #{tpu_custom_call.1} parent=1 // pred_check_branch
      %15 = sbr.rel (0) target = $region5
    $region4: #{tpu_custom_call.1} parent=1 // pred_region
      %s17 = ssub.s32 2048, 2048
      %18 = vsyncadd [#allocation3], %s17
      %s19 = sshll.u32 [#allocation2], 4
      %s20 = int_to_ptr.vmem [resolvable:$true] %s19
      %25 = dma.hbm_to_vmem [thread:$0]  %s0, 2048, %s20, [#allocation3], 128, 128, 8
    $region5: #{tpu_custom_call.1} parent=1 // pred_fallthru
      _
    // Predicated region
    $region6: #{tpu_custom_call.1} parent=1 // pred_check
      _
    $region7: #{tpu_custom_call.1} parent=1 // pred_check_branch
      %27 = sbr.rel (0) target = $region9
    $region8: #{tpu_custom_call.1} parent=1 // pred_region
      _
    $region9: #{tpu_custom_call.1} parent=1 // pred_fallthru
      _
    // Predicated region
    $region10: #{tpu_custom_call.1} parent=1 // pred_check
      _
    $region11: #{tpu_custom_call.1} parent=1 // pred_check_branch
      %29 = sbr.rel (0) target = $region13
    $region12: #{tpu_custom_call.1} parent=1 // pred_region
      _
    $region13: #{tpu_custom_call.1} parent=1 // pred_fallthru
      _
    // Predicated region
    $region14: #{tpu_custom_call.1} parent=1 // pred_check
      _
    $region15: #{tpu_custom_call.1} parent=1 // pred_check_branch
      %31 = sbr.rel (0) target = $region17
    $region16: #{tpu_custom_call.1} parent=1 // pred_region
      _
    $region17: #{tpu_custom_call.1} parent=1 // pred_fallthru
      _
    // Predicated region
    $region18: #{tpu_custom_call.1} parent=1 // pred_check
      _
    $region19: #{tpu_custom_call.1} parent=1 // pred_check_branch
      %33 = sbr.rel (0) target = $region21
    $region20: #{tpu_custom_call.1} parent=1 // pred_region
      _
    $region21: #{tpu_custom_call.1} parent=1 // pred_fallthru
      _
    // Predicated region
    $region22: #{tpu_custom_call.1} parent=1 // pred_check
      _
    $region23: #{tpu_custom_call.1} parent=1 // pred_check_branch
      %35 = sbr.rel (0) target = $region25
    $region24: #{tpu_custom_call.1} parent=1 // pred_region
      %36 = dma.done [#allocation3], 2048
    $region25: #{tpu_custom_call.1} parent=1 // pred_fallthru
      _
    %v37 = vld [vmem:[#allocation2] sm:$0xff]
    %v38 = vld [vmem:[#allocation2 + $0x8] sm:$0xff]
    %v39 = vld [vmem:[#allocation2 + $0x10] sm:$0xff]
    %v40 = vld [vmem:[#allocation2 + $0x18] sm:$0xff]
    %v41 = vld [vmem:[#allocation2 + $0x20] sm:$0xff]
    %v42 = vld [vmem:[#allocation2 + $0x28] sm:$0xff]
    %v43 = vld [vmem:[#allocation2 + $0x30] sm:$0xff]
    %v44 = vld [vmem:[#allocation2 + $0x38] sm:$0xff]
    %v45 = vld [vmem:[#allocation2 + $0x40] sm:$0xff]
    %v46 = vld [vmem:[#allocation2 + $0x48] sm:$0xff]
    %v47 = vld [vmem:[#allocation2 + $0x50] sm:$0xff]
    %v48 = vld [vmem:[#allocation2 + $0x58] sm:$0xff]
    %v49 = vld [vmem:[#allocation2 + $0x60] sm:$0xff]
    %v50 = vld [vmem:[#allocation2 + $0x68] sm:$0xff]
    %v51 = vld [vmem:[#allocation2 + $0x70] sm:$0xff]
    %v52 = vld [vmem:[#allocation2 + $0x78] sm:$0xff]
    %v53 = vld [vmem:[%s1] sm:$0xff]
    %v54 = vld [vmem:[%s2] sm:$0xff]
    %v55 = vld [vmem:[%s2 + $0x8] sm:$0xff]
    %vm56 = vcmask 130048
    %v58 = vsel %vm56, %v53, 0
    %60 = vmatprep.subr.mxu0 0.0
    %61 = vmatpush1.msra.mxu0 %v37
    %62 = vmatprep.subr.mxu0 0.0
    %63 = vmatpush1.msra.mxu0 %v38
    %64 = vmatprep.subr.mxu0 0.0
    %65 = vmatpush1.msra.mxu0 0.0
    %66 = vmatprep.subr.mxu0 0.0
    %67 = vmatpush1.msra.mxu0 0.0
    %68 = vmatprep.subr.mxu0 0.0
    %69 = vmatpush1.msra.mxu0 0.0
    %70 = vmatprep.subr.mxu0 0.0
    %71 = vmatpush1.msra.mxu0 0.0
    %72 = vmatprep.subr.mxu0 0.0
    %73 = vmatpush1.msra.mxu0 0.0
    %74 = vmatprep.subr.mxu0 0.0
    %75 = vmatpush1.msra.mxu0 0.0
    %76 = vmatprep.subr.mxu0 0.0
    %77 = vmatpush1.msra.mxu0 0.0
    %78 = vmatprep.subr.mxu0 0.0
    %79 = vmatpush1.msra.mxu0 0.0
    %80 = vmatprep.subr.mxu0 0.0
    %81 = vmatpush1.msra.mxu0 0.0
    %82 = vmatprep.subr.mxu0 0.0
    %83 = vmatpush1.msra.mxu0 0.0
    %84 = vmatprep.subr.mxu0 0.0
    %85 = vmatpush1.msra.mxu0 0.0
    %86 = vmatprep.subr.mxu0 0.0
    %87 = vmatpush1.msra.mxu0 0.0
    %88 = vmatprep.subr.mxu0 0.0
    %89 = vmatpush1.msra.mxu0 0.0
    %90 = vmatprep.subr.mxu0 0.0
    %91 = vmatpush1.msra.mxu0 0.0
    %92 = vmatprep.subr.mxu0 0.0
    %93 = vmatpush1.msra.mxu0 0.0
    %94 = vmatprep.subr.mxu0 0.0
    %95 = vmatpush1.msra.mxu0 0.0
    %96 = vmatprep.subr.mxu0 0.0
    %97 = vmatpush1.msra.mxu0 0.0
    %98 = vmatprep.subr.mxu0 0.0
    %99 = vmatpush1.msra.mxu0 0.0
    %100 = vmatprep.subr.mxu0 0.0
    %101 = vmatpush1.msra.mxu0 0.0
    %102 = vmatprep.subr.mxu0 0.0
    %103 = vmatpush1.msra.mxu0 0.0
    %104 = vmatprep.subr.mxu0 0.0
    %105 = vmatpush1.msra.mxu0 0.0
    %106 = vmatprep.subr.mxu0 0.0
    %107 = vmatpush1.msra.mxu0 0.0
    %108 = vmatprep.subr.mxu0 0.0
    %109 = vmatpush1.msra.mxu0 0.0
    %110 = vmatprep.subr.mxu0 0.0
    %111 = vmatpush1.msra.mxu0 0.0
    %112 = vmatprep.subr.mxu0 0.0
    %113 = vmatpush1.msra.mxu0 0.0
    %114 = vmatprep.subr.mxu0 0.0
    %115 = vmatpush1.msra.mxu0 0.0
    %116 = vmatprep.subr.mxu0 0.0
    %117 = vmatpush1.msra.mxu0 0.0
    %118 = vmatprep.subr.mxu0 0.0
    %119 = vmatpush1.msra.mxu0 0.0
    %120 = vmatprep.subr.mxu0 0.0
    %121 = vmatpush1.msra.mxu0 0.0
    %122 = vmatprep.subr.mxu0 0.0
    %123 = vmatpush1.msra.mxu0 0.0
    %124 = vmatprep.mubr.f32.mxu0 0.0
    %125 = vmatmul.mubr.f32.gmra.mrb[0].mxu0 %v58
    %v126 = vpop.f32.mrb[0].mxu0
    %v127 = vadd.f32 0.0, %v126
    %v128 = vpop.f32.mrb[0].mxu0
    %129 = vdwg.mxu0
    %130 = vmatprep.subr.mxu0 0.0
    %131 = vmatpush1.msra.mxu0 %v39
    %132 = vmatprep.subr.mxu0 0.0
    %133 = vmatpush1.msra.mxu0 %v40
    %134 = vmatprep.subr.mxu0 0.0
    %135 = vmatpush1.msra.mxu0 0.0
    %136 = vmatprep.subr.mxu0 0.0
    %137 = vmatpush1.msra.mxu0 0.0
    %138 = vmatprep.subr.mxu0 0.0
    %139 = vmatpush1.msra.mxu0 0.0
    %140 = vmatprep.subr.mxu0 0.0
    %141 = vmatpush1.msra.mxu0 0.0
    %142 = vmatprep.subr.mxu0 0.0
    %143 = vmatpush1.msra.mxu0 0.0
    %144 = vmatprep.subr.mxu0 0.0
    %145 = vmatpush1.msra.mxu0 0.0
    %146 = vmatprep.subr.mxu0 0.0
    %147 = vmatpush1.msra.mxu0 0.0
    %148 = vmatprep.subr.mxu0 0.0
    %149 = vmatpush1.msra.mxu0 0.0
    %150 = vmatprep.subr.mxu0 0.0
    %151 = vmatpush1.msra.mxu0 0.0
    %152 = vmatprep.subr.mxu0 0.0
    %153 = vmatpush1.msra.mxu0 0.0
    %154 = vmatprep.subr.mxu0 0.0
    %155 = vmatpush1.msra.mxu0 0.0
    %156 = vmatprep.subr.mxu0 0.0
    %157 = vmatpush1.msra.mxu0 0.0
    %158 = vmatprep.subr.mxu0 0.0
    %159 = vmatpush1.msra.mxu0 0.0
    %160 = vmatprep.subr.mxu0 0.0
    %161 = vmatpush1.msra.mxu0 0.0
    %162 = vmatprep.subr.mxu0 0.0
    %163 = vmatpush1.msra.mxu0 0.0
    %164 = vmatprep.subr.mxu0 0.0
    %165 = vmatpush1.msra.mxu0 0.0
    %166 = vmatprep.subr.mxu0 0.0
    %167 = vmatpush1.msra.mxu0 0.0
    %168 = vmatprep.subr.mxu0 0.0
    %169 = vmatpush1.msra.mxu0 0.0
    %170 = vmatprep.subr.mxu0 0.0
    %171 = vmatpush1.msra.mxu0 0.0
    %172 = vmatprep.subr.mxu0 0.0
    %173 = vmatpush1.msra.mxu0 0.0
    %174 = vmatprep.subr.mxu0 0.0
    %175 = vmatpush1.msra.mxu0 0.0
    %176 = vmatprep.subr.mxu0 0.0
    %177 = vmatpush1.msra.mxu0 0.0
    %178 = vmatprep.subr.mxu0 0.0
    %179 = vmatpush1.msra.mxu0 0.0
    %180 = vmatprep.subr.mxu0 0.0
    %181 = vmatpush1.msra.mxu0 0.0
    %182 = vmatprep.subr.mxu0 0.0
    %183 = vmatpush1.msra.mxu0 0.0
    %184 = vmatprep.subr.mxu0 0.0
    %185 = vmatpush1.msra.mxu0 0.0
    %186 = vmatprep.subr.mxu0 0.0
    %187 = vmatpush1.msra.mxu0 0.0
    %188 = vmatprep.subr.mxu0 0.0
    %189 = vmatpush1.msra.mxu0 0.0
    %190 = vmatprep.subr.mxu0 0.0
    %191 = vmatpush1.msra.mxu0 0.0
    %192 = vmatprep.subr.mxu0 0.0
    %193 = vmatpush1.msra.mxu0 0.0
    %194 = vmatprep.mubr.f32.mxu0 0.0
    %195 = vmatmul.mubr.f32.gmra.mrb[0].mxu0 %v58
    %v196 = vpop.f32.mrb[0].mxu0
    %v197 = vadd.f32 0.0, %v196
    %v198 = vpop.f32.mrb[0].mxu0
    %199 = vdwg.mxu0
    %200 = vmatprep.subr.mxu0 0.0
    %201 = vmatpush1.msra.mxu0 %v41
    %202 = vmatprep.subr.mxu0 0.0
    %203 = vmatpush1.msra.mxu0 %v42
    %204 = vmatprep.subr.mxu0 0.0
    %205 = vmatpush1.msra.mxu0 0.0
    %206 = vmatprep.subr.mxu0 0.0
    %207 = vmatpush1.msra.mxu0 0.0
    %208 = vmatprep.subr.mxu0 0.0
    %209 = vmatpush1.msra.mxu0 0.0
    %210 = vmatprep.subr.mxu0 0.0
    %211 = vmatpush1.msra.mxu0 0.0
    %212 = vmatprep.subr.mxu0 0.0
    %213 = vmatpush1.msra.mxu0 0.0
    %214 = vmatprep.subr.mxu0 0.0
    %215 = vmatpush1.msra.mxu0 0.0
    %216 = vmatprep.subr.mxu0 0.0
    %217 = vmatpush1.msra.mxu0 0.0
    %218 = vmatprep.subr.mxu0 0.0
    %219 = vmatpush1.msra.mxu0 0.0
    %220 = vmatprep.subr.mxu0 0.0
    %221 = vmatpush1.msra.mxu0 0.0
    %222 = vmatprep.subr.mxu0 0.0
    %223 = vmatpush1.msra.mxu0 0.0
    %224 = vmatprep.subr.mxu0 0.0
    %225 = vmatpush1.msra.mxu0 0.0
    %226 = vmatprep.subr.mxu0 0.0
    %227 = vmatpush1.msra.mxu0 0.0
    %228 = vmatprep.subr.mxu0 0.0
    %229 = vmatpush1.msra.mxu0 0.0
    %230 = vmatprep.subr.mxu0 0.0
    %231 = vmatpush1.msra.mxu0 0.0
    %232 = vmatprep.subr.mxu0 0.0
    %233 = vmatpush1.msra.mxu0 0.0
    %234 = vmatprep.subr.mxu0 0.0
    %235 = vmatpush1.msra.mxu0 0.0
    %236 = vmatprep.subr.mxu0 0.0
    %237 = vmatpush1.msra.mxu0 0.0
    %238 = vmatprep.subr.mxu0 0.0
    %239 = vmatpush1.msra.mxu0 0.0
    %240 = vmatprep.subr.mxu0 0.0
    %241 = vmatpush1.msra.mxu0 0.0
    %242 = vmatprep.subr.mxu0 0.0
    %243 = vmatpush1.msra.mxu0 0.0
    %244 = vmatprep.subr.mxu0 0.0
    %245 = vmatpush1.msra.mxu0 0.0
    %246 = vmatprep.subr.mxu0 0.0
    %247 = vmatpush1.msra.mxu0 0.0
    %248 = vmatprep.subr.mxu0 0.0
    %249 = vmatpush1.msra.mxu0 0.0
    %250 = vmatprep.subr.mxu0 0.0
    %251 = vmatpush1.msra.mxu0 0.0
    %252 = vmatprep.subr.mxu0 0.0
    %253 = vmatpush1.msra.mxu0 0.0
    %254 = vmatprep.subr.mxu0 0.0
    %255 = vmatpush1.msra.mxu0 0.0
    %256 = vmatprep.subr.mxu0 0.0
    %257 = vmatpush1.msra.mxu0 0.0
    %258 = vmatprep.subr.mxu0 0.0
    %259 = vmatpush1.msra.mxu0 0.0
    %260 = vmatprep.subr.mxu0 0.0
    %261 = vmatpush1.msra.mxu0 0.0
    %262 = vmatprep.subr.mxu0 0.0
    %263 = vmatpush1.msra.mxu0 0.0
    %264 = vmatprep.mubr.f32.mxu0 0.0
    %265 = vmatmul.mubr.f32.gmra.mrb[0].mxu0 %v58
    %v266 = vpop.f32.mrb[0].mxu0
    %v267 = vadd.f32 0.0, %v266
    %v268 = vpop.f32.mrb[0].mxu0
    %269 = vdwg.mxu0
    %270 = vmatprep.subr.mxu0 0.0
    %271 = vmatpush1.msra.mxu0 %v43
    %272 = vmatprep.subr.mxu0 0.0
    %273 = vmatpush1.msra.mxu0 %v44
    %274 = vmatprep.subr.mxu0 0.0
    %275 = vmatpush1.msra.mxu0 0.0
    %276 = vmatprep.subr.mxu0 0.0
    %277 = vmatpush1.msra.mxu0 0.0
    %278 = vmatprep.subr.mxu0 0.0
    %279 = vmatpush1.msra.mxu0 0.0
    %280 = vmatprep.subr.mxu0 0.0
    %281 = vmatpush1.msra.mxu0 0.0
    %282 = vmatprep.subr.mxu0 0.0
    %283 = vmatpush1.msra.mxu0 0.0
    %284 = vmatprep.subr.mxu0 0.0
    %285 = vmatpush1.msra.mxu0 0.0
    %286 = vmatprep.subr.mxu0 0.0
    %287 = vmatpush1.msra.mxu0 0.0
    %288 = vmatprep.subr.mxu0 0.0
    %289 = vmatpush1.msra.mxu0 0.0
    %290 = vmatprep.subr.mxu0 0.0
    %291 = vmatpush1.msra.mxu0 0.0
    %292 = vmatprep.subr.mxu0 0.0
    %293 = vmatpush1.msra.mxu0 0.0
    %294 = vmatprep.subr.mxu0 0.0
    %295 = vmatpush1.msra.mxu0 0.0
    %296 = vmatprep.subr.mxu0 0.0
    %297 = vmatpush1.msra.mxu0 0.0
    %298 = vmatprep.subr.mxu0 0.0
    %299 = vmatpush1.msra.mxu0 0.0
    %300 = vmatprep.subr.mxu0 0.0
    %301 = vmatpush1.msra.mxu0 0.0
    %302 = vmatprep.subr.mxu0 0.0
    %303 = vmatpush1.msra.mxu0 0.0
    %304 = vmatprep.subr.mxu0 0.0
    %305 = vmatpush1.msra.mxu0 0.0
    %306 = vmatprep.subr.mxu0 0.0
    %307 = vmatpush1.msra.mxu0 0.0
    %308 = vmatprep.subr.mxu0 0.0
    %309 = vmatpush1.msra.mxu0 0.0
    %310 = vmatprep.subr.mxu0 0.0
    %311 = vmatpush1.msra.mxu0 0.0
    %312 = vmatprep.subr.mxu0 0.0
    %313 = vmatpush1.msra.mxu0 0.0
    %314 = vmatprep.subr.mxu0 0.0
    %315 = vmatpush1.msra.mxu0 0.0
    %316 = vmatprep.subr.mxu0 0.0
    %317 = vmatpush1.msra.mxu0 0.0
    %318 = vmatprep.subr.mxu0 0.0
    %319 = vmatpush1.msra.mxu0 0.0
    %320 = vmatprep.subr.mxu0 0.0
    %321 = vmatpush1.msra.mxu0 0.0
    %322 = vmatprep.subr.mxu0 0.0
    %323 = vmatpush1.msra.mxu0 0.0
    %324 = vmatprep.subr.mxu0 0.0
    %325 = vmatpush1.msra.mxu0 0.0
    %326 = vmatprep.subr.mxu0 0.0
    %327 = vmatpush1.msra.mxu0 0.0
    %328 = vmatprep.subr.mxu0 0.0
    %329 = vmatpush1.msra.mxu0 0.0
    %330 = vmatprep.subr.mxu0 0.0
    %331 = vmatpush1.msra.mxu0 0.0
    %332 = vmatprep.subr.mxu0 0.0
    %333 = vmatpush1.msra.mxu0 0.0
    %334 = vmatprep.mubr.f32.mxu0 0.0
    %335 = vmatmul.mubr.f32.gmra.mrb[0].mxu0 %v58
    %v336 = vpop.f32.mrb[0].mxu0
    %v337 = vadd.f32 0.0, %v336
    %v338 = vpop.f32.mrb[0].mxu0
    %339 = vdwg.mxu0
    %340 = vmatprep.subr.mxu0 0.0
    %341 = vmatpush1.msra.mxu0 %v45
    %342 = vmatprep.subr.mxu0 0.0
    %343 = vmatpush1.msra.mxu0 %v46
    %344 = vmatprep.subr.mxu0 0.0
    %345 = vmatpush1.msra.mxu0 0.0
    %346 = vmatprep.subr.mxu0 0.0
    %347 = vmatpush1.msra.mxu0 0.0
    %348 = vmatprep.subr.mxu0 0.0
    %349 = vmatpush1.msra.mxu0 0.0
    %350 = vmatprep.subr.mxu0 0.0
    %351 = vmatpush1.msra.mxu0 0.0
    %352 = vmatprep.subr.mxu0 0.0
    %353 = vmatpush1.msra.mxu0 0.0
    %354 = vmatprep.subr.mxu0 0.0
    %355 = vmatpush1.msra.mxu0 0.0
    %356 = vmatprep.subr.mxu0 0.0
    %357 = vmatpush1.msra.mxu0 0.0
    %358 = vmatprep.subr.mxu0 0.0
    %359 = vmatpush1.msra.mxu0 0.0
    %360 = vmatprep.subr.mxu0 0.0
    %361 = vmatpush1.msra.mxu0 0.0
    %362 = vmatprep.subr.mxu0 0.0
    %363 = vmatpush1.msra.mxu0 0.0
    %364 = vmatprep.subr.mxu0 0.0
    %365 = vmatpush1.msra.mxu0 0.0
    %366 = vmatprep.subr.mxu0 0.0
    %367 = vmatpush1.msra.mxu0 0.0
    %368 = vmatprep.subr.mxu0 0.0
    %369 = vmatpush1.msra.mxu0 0.0
    %370 = vmatprep.subr.mxu0 0.0
    %371 = vmatpush1.msra.mxu0 0.0
    %372 = vmatprep.subr.mxu0 0.0
    %373 = vmatpush1.msra.mxu0 0.0
    %374 = vmatprep.subr.mxu0 0.0
    %375 = vmatpush1.msra.mxu0 0.0
    %376 = vmatprep.subr.mxu0 0.0
    %377 = vmatpush1.msra.mxu0 0.0
    %378 = vmatprep.subr.mxu0 0.0
    %379 = vmatpush1.msra.mxu0 0.0
    %380 = vmatprep.subr.mxu0 0.0
    %381 = vmatpush1.msra.mxu0 0.0
    %382 = vmatprep.subr.mxu0 0.0
    %383 = vmatpush1.msra.mxu0 0.0
    %384 = vmatprep.subr.mxu0 0.0
    %385 = vmatpush1.msra.mxu0 0.0
    %386 = vmatprep.subr.mxu0 0.0
    %387 = vmatpush1.msra.mxu0 0.0
    %388 = vmatprep.subr.mxu0 0.0
    %389 = vmatpush1.msra.mxu0 0.0
    %390 = vmatprep.subr.mxu0 0.0
    %391 = vmatpush1.msra.mxu0 0.0
    %392 = vmatprep.subr.mxu0 0.0
    %393 = vmatpush1.msra.mxu0 0.0
    %394 = vmatprep.subr.mxu0 0.0
    %395 = vmatpush1.msra.mxu0 0.0
    %396 = vmatprep.subr.mxu0 0.0
    %397 = vmatpush1.msra.mxu0 0.0
    %398 = vmatprep.subr.mxu0 0.0
    %399 = vmatpush1.msra.mxu0 0.0
    %400 = vmatprep.subr.mxu0 0.0
    %401 = vmatpush1.msra.mxu0 0.0
    %402 = vmatprep.subr.mxu0 0.0
    %403 = vmatpush1.msra.mxu0 0.0
    %404 = vmatprep.mubr.f32.mxu0 0.0
    %405 = vmatmul.mubr.f32.gmra.mrb[0].mxu0 %v58
    %v406 = vpop.f32.mrb[0].mxu0
    %v407 = vadd.f32 0.0, %v406
    %v408 = vpop.f32.mrb[0].mxu0
    %409 = vdwg.mxu0
    %410 = vmatprep.subr.mxu0 0.0
    %411 = vmatpush1.msra.mxu0 %v47
    %412 = vmatprep.subr.mxu0 0.0
    %413 = vmatpush1.msra.mxu0 %v48
    %414 = vmatprep.subr.mxu0 0.0
    %415 = vmatpush1.msra.mxu0 0.0
    %416 = vmatprep.subr.mxu0 0.0
    %417 = vmatpush1.msra.mxu0 0.0
    %418 = vmatprep.subr.mxu0 0.0
    %419 = vmatpush1.msra.mxu0 0.0
    %420 = vmatprep.subr.mxu0 0.0
    %421 = vmatpush1.msra.mxu0 0.0
    %422 = vmatprep.subr.mxu0 0.0
    %423 = vmatpush1.msra.mxu0 0.0
    %424 = vmatprep.subr.mxu0 0.0
    %425 = vmatpush1.msra.mxu0 0.0
    %426 = vmatprep.subr.mxu0 0.0
    %427 = vmatpush1.msra.mxu0 0.0
    %428 = vmatprep.subr.mxu0 0.0
    %429 = vmatpush1.msra.mxu0 0.0
    %430 = vmatprep.subr.mxu0 0.0
    %431 = vmatpush1.msra.mxu0 0.0
    %432 = vmatprep.subr.mxu0 0.0
    %433 = vmatpush1.msra.mxu0 0.0
    %434 = vmatprep.subr.mxu0 0.0
    %435 = vmatpush1.msra.mxu0 0.0
    %436 = vmatprep.subr.mxu0 0.0
    %437 = vmatpush1.msra.mxu0 0.0
    %438 = vmatprep.subr.mxu0 0.0
    %439 = vmatpush1.msra.mxu0 0.0
    %440 = vmatprep.subr.mxu0 0.0
    %441 = vmatpush1.msra.mxu0 0.0
    %442 = vmatprep.subr.mxu0 0.0
    %443 = vmatpush1.msra.mxu0 0.0
    %444 = vmatprep.subr.mxu0 0.0
    %445 = vmatpush1.msra.mxu0 0.0
    %446 = vmatprep.subr.mxu0 0.0
    %447 = vmatpush1.msra.mxu0 0.0
    %448 = vmatprep.subr.mxu0 0.0
    %449 = vmatpush1.msra.mxu0 0.0
    %450 = vmatprep.subr.mxu0 0.0
    %451 = vmatpush1.msra.mxu0 0.0
    %452 = vmatprep.subr.mxu0 0.0
    %453 = vmatpush1.msra.mxu0 0.0
    %454 = vmatprep.subr.mxu0 0.0
    %455 = vmatpush1.msra.mxu0 0.0
    %456 = vmatprep.subr.mxu0 0.0
    %457 = vmatpush1.msra.mxu0 0.0
    %458 = vmatprep.subr.mxu0 0.0
    %459 = vmatpush1.msra.mxu0 0.0
    %460 = vmatprep.subr.mxu0 0.0
    %461 = vmatpush1.msra.mxu0 0.0
    %462 = vmatprep.subr.mxu0 0.0
    %463 = vmatpush1.msra.mxu0 0.0
    %464 = vmatprep.subr.mxu0 0.0
    %465 = vmatpush1.msra.mxu0 0.0
    %466 = vmatprep.subr.mxu0 0.0
    %467 = vmatpush1.msra.mxu0 0.0
    %468 = vmatprep.subr.mxu0 0.0
    %469 = vmatpush1.msra.mxu0 0.0
    %470 = vmatprep.subr.mxu0 0.0
    %471 = vmatpush1.msra.mxu0 0.0
    %472 = vmatprep.subr.mxu0 0.0
    %473 = vmatpush1.msra.mxu0 0.0
    %474 = vmatprep.mubr.f32.mxu0 0.0
    %475 = vmatmul.mubr.f32.gmra.mrb[0].mxu0 %v58
    %v476 = vpop.f32.mrb[0].mxu0
    %v477 = vadd.f32 0.0, %v476
    %v478 = vpop.f32.mrb[0].mxu0
    %479 = vdwg.mxu0
    %480 = vmatprep.subr.mxu0 0.0
    %481 = vmatpush1.msra.mxu0 %v49
    %482 = vmatprep.subr.mxu0 0.0
    %483 = vmatpush1.msra.mxu0 %v50
    %484 = vmatprep.subr.mxu0 0.0
    %485 = vmatpush1.msra.mxu0 0.0
    %486 = vmatprep.subr.mxu0 0.0
    %487 = vmatpush1.msra.mxu0 0.0
    %488 = vmatprep.subr.mxu0 0.0
    %489 = vmatpush1.msra.mxu0 0.0
    %490 = vmatprep.subr.mxu0 0.0
    %491 = vmatpush1.msra.mxu0 0.0
    %492 = vmatprep.subr.mxu0 0.0
    %493 = vmatpush1.msra.mxu0 0.0
    %494 = vmatprep.subr.mxu0 0.0
    %495 = vmatpush1.msra.mxu0 0.0
    %496 = vmatprep.subr.mxu0 0.0
    %497 = vmatpush1.msra.mxu0 0.0
    %498 = vmatprep.subr.mxu0 0.0
    %499 = vmatpush1.msra.mxu0 0.0
    %500 = vmatprep.subr.mxu0 0.0
    %501 = vmatpush1.msra.mxu0 0.0
    %502 = vmatprep.subr.mxu0 0.0
    %503 = vmatpush1.msra.mxu0 0.0
    %504 = vmatprep.subr.mxu0 0.0
    %505 = vmatpush1.msra.mxu0 0.0
    %506 = vmatprep.subr.mxu0 0.0
    %507 = vmatpush1.msra.mxu0 0.0
    %508 = vmatprep.subr.mxu0 0.0
    %509 = vmatpush1.msra.mxu0 0.0
    %510 = vmatprep.subr.mxu0 0.0
    %511 = vmatpush1.msra.mxu0 0.0
    %512 = vmatprep.subr.mxu0 0.0
    %513 = vmatpush1.msra.mxu0 0.0
    %514 = vmatprep.subr.mxu0 0.0
    %515 = vmatpush1.msra.mxu0 0.0
    %516 = vmatprep.subr.mxu0 0.0
    %517 = vmatpush1.msra.mxu0 0.0
    %518 = vmatprep.subr.mxu0 0.0
    %519 = vmatpush1.msra.mxu0 0.0
    %520 = vmatprep.subr.mxu0 0.0
    %521 = vmatpush1.msra.mxu0 0.0
    %522 = vmatprep.subr.mxu0 0.0
    %523 = vmatpush1.msra.mxu0 0.0
    %524 = vmatprep.subr.mxu0 0.0
    %525 = vmatpush1.msra.mxu0 0.0
    %526 = vmatprep.subr.mxu0 0.0
    %527 = vmatpush1.msra.mxu0 0.0
    %528 = vmatprep.subr.mxu0 0.0
    %529 = vmatpush1.msra.mxu0 0.0
    %530 = vmatprep.subr.mxu0 0.0
    %531 = vmatpush1.msra.mxu0 0.0
    %532 = vmatprep.subr.mxu0 0.0
    %533 = vmatpush1.msra.mxu0 0.0
    %534 = vmatprep.subr.mxu0 0.0
    %535 = vmatpush1.msra.mxu0 0.0
    %536 = vmatprep.subr.mxu0 0.0
    %537 = vmatpush1.msra.mxu0 0.0
    %538 = vmatprep.subr.mxu0 0.0
    %539 = vmatpush1.msra.mxu0 0.0
    %540 = vmatprep.subr.mxu0 0.0
    %541 = vmatpush1.msra.mxu0 0.0
    %542 = vmatprep.subr.mxu0 0.0
    %543 = vmatpush1.msra.mxu0 0.0
    %544 = vmatprep.mubr.f32.mxu0 0.0
    %545 = vmatmul.mubr.f32.gmra.mrb[0].mxu0 %v58
    %v546 = vpop.f32.mrb[0].mxu0
    %v547 = vadd.f32 0.0, %v546
    %v548 = vpop.f32.mrb[0].mxu0
    %549 = vdwg.mxu0
    %550 = vmatprep.subr.mxu0 0.0
    %551 = vmatpush1.msra.mxu0 %v51
    %552 = vmatprep.subr.mxu0 0.0
    %553 = vmatpush1.msra.mxu0 %v52
    %554 = vmatprep.subr.mxu0 0.0
    %555 = vmatpush1.msra.mxu0 0.0
    %556 = vmatprep.subr.mxu0 0.0
    %557 = vmatpush1.msra.mxu0 0.0
    %558 = vmatprep.subr.mxu0 0.0
    %559 = vmatpush1.msra.mxu0 0.0
    %560 = vmatprep.subr.mxu0 0.0
    %561 = vmatpush1.msra.mxu0 0.0
    %562 = vmatprep.subr.mxu0 0.0
    %563 = vmatpush1.msra.mxu0 0.0
    %564 = vmatprep.subr.mxu0 0.0
    %565 = vmatpush1.msra.mxu0 0.0
    %566 = vmatprep.subr.mxu0 0.0
    %567 = vmatpush1.msra.mxu0 0.0
    %568 = vmatprep.subr.mxu0 0.0
    %569 = vmatpush1.msra.mxu0 0.0
    %570 = vmatprep.subr.mxu0 0.0
    %571 = vmatpush1.msra.mxu0 0.0
    %572 = vmatprep.subr.mxu0 0.0
    %573 = vmatpush1.msra.mxu0 0.0
    %574 = vmatprep.subr.mxu0 0.0
    %575 = vmatpush1.msra.mxu0 0.0
    %576 = vmatprep.subr.mxu0 0.0
    %577 = vmatpush1.msra.mxu0 0.0
    %578 = vmatprep.subr.mxu0 0.0
    %579 = vmatpush1.msra.mxu0 0.0
    %580 = vmatprep.subr.mxu0 0.0
    %581 = vmatpush1.msra.mxu0 0.0
    %582 = vmatprep.subr.mxu0 0.0
    %583 = vmatpush1.msra.mxu0 0.0
    %584 = vmatprep.subr.mxu0 0.0
    %585 = vmatpush1.msra.mxu0 0.0
    %586 = vmatprep.subr.mxu0 0.0
    %587 = vmatpush1.msra.mxu0 0.0
    %588 = vmatprep.subr.mxu0 0.0
    %589 = vmatpush1.msra.mxu0 0.0
    %590 = vmatprep.subr.mxu0 0.0
    %591 = vmatpush1.msra.mxu0 0.0
    %592 = vmatprep.subr.mxu0 0.0
    %593 = vmatpush1.msra.mxu0 0.0
    %594 = vmatprep.subr.mxu0 0.0
    %595 = vmatpush1.msra.mxu0 0.0
    %596 = vmatprep.subr.mxu0 0.0
    %597 = vmatpush1.msra.mxu0 0.0
    %598 = vmatprep.subr.mxu0 0.0
    %599 = vmatpush1.msra.mxu0 0.0
    %600 = vmatprep.subr.mxu0 0.0
    %601 = vmatpush1.msra.mxu0 0.0
    %602 = vmatprep.subr.mxu0 0.0
    %603 = vmatpush1.msra.mxu0 0.0
    %604 = vmatprep.subr.mxu0 0.0
    %605 = vmatpush1.msra.mxu0 0.0
    %606 = vmatprep.subr.mxu0 0.0
    %607 = vmatpush1.msra.mxu0 0.0
    %608 = vmatprep.subr.mxu0 0.0
    %609 = vmatpush1.msra.mxu0 0.0
    %610 = vmatprep.subr.mxu0 0.0
    %611 = vmatpush1.msra.mxu0 0.0
    %612 = vmatprep.subr.mxu0 0.0
    %613 = vmatpush1.msra.mxu0 0.0
    %614 = vmatprep.mubr.f32.mxu0 0.0
    %615 = vmatmul.mubr.f32.gmra.mrb[0].mxu0 %v58
    %v616 = vpop.f32.mrb[0].mxu0
    %v617 = vadd.f32 0.0, %v616
    %v618 = vpop.f32.mrb[0].mxu0
    %619 = vdwg.mxu0
    %v621 = vsel %vm56, %v127, 0
    %623 = vmatprep.subr.mxu0 0.0
    %624 = vmatpush1.msra.mxu0 %v54
    %625 = vmatprep.subr.mxu0 0.0
    %626 = vmatpush1.msra.mxu0 %v55
    %627 = vmatprep.subr.mxu0 0.0
    %628 = vmatpush1.msra.mxu0 0.0
    %629 = vmatprep.subr.mxu0 0.0
    %630 = vmatpush1.msra.mxu0 0.0
    %631 = vmatprep.subr.mxu0 0.0
    %632 = vmatpush1.msra.mxu0 0.0
    %633 = vmatprep.subr.mxu0 0.0
    %634 = vmatpush1.msra.mxu0 0.0
    %635 = vmatprep.subr.mxu0 0.0
    %636 = vmatpush1.msra.mxu0 0.0
    %637 = vmatprep.subr.mxu0 0.0
    %638 = vmatpush1.msra.mxu0 0.0
    %639 = vmatprep.subr.mxu0 0.0
    %640 = vmatpush1.msra.mxu0 0.0
    %641 = vmatprep.subr.mxu0 0.0
    %642 = vmatpush1.msra.mxu0 0.0
    %643 = vmatprep.subr.mxu0 0.0
    %644 = vmatpush1.msra.mxu0 0.0
    %645 = vmatprep.subr.mxu0 0.0
    %646 = vmatpush1.msra.mxu0 0.0
    %647 = vmatprep.subr.mxu0 0.0
    %648 = vmatpush1.msra.mxu0 0.0
    %649 = vmatprep.subr.mxu0 0.0
    %650 = vmatpush1.msra.mxu0 0.0
    %651 = vmatprep.subr.mxu0 0.0
    %652 = vmatpush1.msra.mxu0 0.0
    %653 = vmatprep.subr.mxu0 0.0
    %654 = vmatpush1.msra.mxu0 0.0
    %655 = vmatprep.subr.mxu0 0.0
    %656 = vmatpush1.msra.mxu0 0.0
    %657 = vmatprep.subr.mxu0 0.0
    %658 = vmatpush1.msra.mxu0 0.0
    %659 = vmatprep.subr.mxu0 0.0
    %660 = vmatpush1.msra.mxu0 0.0
    %661 = vmatprep.subr.mxu0 0.0
    %662 = vmatpush1.msra.mxu0 0.0
    %663 = vmatprep.subr.mxu0 0.0
    %664 = vmatpush1.msra.mxu0 0.0
    %665 = vmatprep.subr.mxu0 0.0
    %666 = vmatpush1.msra.mxu0 0.0
    %667 = vmatprep.subr.mxu0 0.0
    %668 = vmatpush1.msra.mxu0 0.0
    %669 = vmatprep.subr.mxu0 0.0
    %670 = vmatpush1.msra.mxu0 0.0
    %671 = vmatprep.subr.mxu0 0.0
    %672 = vmatpush1.msra.mxu0 0.0
    %673 = vmatprep.subr.mxu0 0.0
    %674 = vmatpush1.msra.mxu0 0.0
    %675 = vmatprep.subr.mxu0 0.0
    %676 = vmatpush1.msra.mxu0 0.0
    %677 = vmatprep.subr.mxu0 0.0
    %678 = vmatpush1.msra.mxu0 0.0
    %679 = vmatprep.subr.mxu0 0.0
    %680 = vmatpush1.msra.mxu0 0.0
    %681 = vmatprep.subr.mxu0 0.0
    %682 = vmatpush1.msra.mxu0 0.0
    %683 = vmatprep.subr.mxu0 0.0
    %684 = vmatpush1.msra.mxu0 0.0
    %685 = vmatprep.subr.mxu0 0.0
    %686 = vmatpush1.msra.mxu0 0.0
    %687 = vmatprep.mubr.f32.mxu0 0.0
    %688 = vmatmul.mubr.f32.gmra.mrb[0].mxu0 %v621
    %v689 = vpop.f32.mrb[0].mxu0
    %v690 = vadd.f32 0.0, %v689
    %v691 = vpop.f32.mrb[0].mxu0
    %692 = vdwg.mxu0
    %v694 = vsel %vm56, %v197, 0
    %696 = vmatprep.subr.mxu0 0.0
    %697 = vmatpush1.msra.mxu0 %v54
    %698 = vmatprep.subr.mxu0 0.0
    %699 = vmatpush1.msra.mxu0 %v55
    %700 = vmatprep.subr.mxu0 0.0
    %701 = vmatpush1.msra.mxu0 0.0
    %702 = vmatprep.subr.mxu0 0.0
    %703 = vmatpush1.msra.mxu0 0.0
    %704 = vmatprep.subr.mxu0 0.0
    %705 = vmatpush1.msra.mxu0 0.0
    %706 = vmatprep.subr.mxu0 0.0
    %707 = vmatpush1.msra.mxu0 0.0
    %708 = vmatprep.subr.mxu0 0.0
    %709 = vmatpush1.msra.mxu0 0.0
    %710 = vmatprep.subr.mxu0 0.0
    %711 = vmatpush1.msra.mxu0 0.0
    %712 = vmatprep.subr.mxu0 0.0
    %713 = vmatpush1.msra.mxu0 0.0
    %714 = vmatprep.subr.mxu0 0.0
    %715 = vmatpush1.msra.mxu0 0.0
    %716 = vmatprep.subr.mxu0 0.0
    %717 = vmatpush1.msra.mxu0 0.0
    %718 = vmatprep.subr.mxu0 0.0
    %719 = vmatpush1.msra.mxu0 0.0
    %720 = vmatprep.subr.mxu0 0.0
    %721 = vmatpush1.msra.mxu0 0.0
    %722 = vmatprep.subr.mxu0 0.0
    %723 = vmatpush1.msra.mxu0 0.0
    %724 = vmatprep.subr.mxu0 0.0
    %725 = vmatpush1.msra.mxu0 0.0
    %726 = vmatprep.subr.mxu0 0.0
    %727 = vmatpush1.msra.mxu0 0.0
    %728 = vmatprep.subr.mxu0 0.0
    %729 = vmatpush1.msra.mxu0 0.0
    %730 = vmatprep.subr.mxu0 0.0
    %731 = vmatpush1.msra.mxu0 0.0
    %732 = vmatprep.subr.mxu0 0.0
    %733 = vmatpush1.msra.mxu0 0.0
    %734 = vmatprep.subr.mxu0 0.0
    %735 = vmatpush1.msra.mxu0 0.0
    %736 = vmatprep.subr.mxu0 0.0
    %737 = vmatpush1.msra.mxu0 0.0
    %738 = vmatprep.subr.mxu0 0.0
    %739 = vmatpush1.msra.mxu0 0.0
    %740 = vmatprep.subr.mxu0 0.0
    %741 = vmatpush1.msra.mxu0 0.0
    %742 = vmatprep.subr.mxu0 0.0
    %743 = vmatpush1.msra.mxu0 0.0
    %744 = vmatprep.subr.mxu0 0.0
    %745 = vmatpush1.msra.mxu0 0.0
    %746 = vmatprep.subr.mxu0 0.0
    %747 = vmatpush1.msra.mxu0 0.0
    %748 = vmatprep.subr.mxu0 0.0
    %749 = vmatpush1.msra.mxu0 0.0
    %750 = vmatprep.subr.mxu0 0.0
    %751 = vmatpush1.msra.mxu0 0.0
    %752 = vmatprep.subr.mxu0 0.0
    %753 = vmatpush1.msra.mxu0 0.0
    %754 = vmatprep.subr.mxu0 0.0
    %755 = vmatpush1.msra.mxu0 0.0
    %756 = vmatprep.subr.mxu0 0.0
    %757 = vmatpush1.msra.mxu0 0.0
    %758 = vmatprep.subr.mxu0 0.0
    %759 = vmatpush1.msra.mxu0 0.0
    %760 = vmatprep.mubr.f32.mxu0 0.0
    %761 = vmatmul.mubr.f32.gmra.mrb[0].mxu0 %v694
    %v762 = vpop.f32.mrb[0].mxu0
    %v763 = vadd.f32 0.0, %v762
    %v764 = vpop.f32.mrb[0].mxu0
    %765 = vdwg.mxu0
    %v767 = vsel %vm56, %v267, 0
    %769 = vmatprep.subr.mxu0 0.0
    %770 = vmatpush1.msra.mxu0 %v54
    %771 = vmatprep.subr.mxu0 0.0
    %772 = vmatpush1.msra.mxu0 %v55
    %773 = vmatprep.subr.mxu0 0.0
    %774 = vmatpush1.msra.mxu0 0.0
    %775 = vmatprep.subr.mxu0 0.0
    %776 = vmatpush1.msra.mxu0 0.0
    %777 = vmatprep.subr.mxu0 0.0
    %778 = vmatpush1.msra.mxu0 0.0
    %779 = vmatprep.subr.mxu0 0.0
    %780 = vmatpush1.msra.mxu0 0.0
    %781 = vmatprep.subr.mxu0 0.0
    %782 = vmatpush1.msra.mxu0 0.0
    %783 = vmatprep.subr.mxu0 0.0
    %784 = vmatpush1.msra.mxu0 0.0
    %785 = vmatprep.subr.mxu0 0.0
    %786 = vmatpush1.msra.mxu0 0.0
    %787 = vmatprep.subr.mxu0 0.0
    %788 = vmatpush1.msra.mxu0 0.0
    %789 = vmatprep.subr.mxu0 0.0
    %790 = vmatpush1.msra.mxu0 0.0
    %791 = vmatprep.subr.mxu0 0.0
    %792 = vmatpush1.msra.mxu0 0.0
    %793 = vmatprep.subr.mxu0 0.0
    %794 = vmatpush1.msra.mxu0 0.0
    %795 = vmatprep.subr.mxu0 0.0
    %796 = vmatpush1.msra.mxu0 0.0
    %797 = vmatprep.subr.mxu0 0.0
    %798 = vmatpush1.msra.mxu0 0.0
    %799 = vmatprep.subr.mxu0 0.0
    %800 = vmatpush1.msra.mxu0 0.0
    %801 = vmatprep.subr.mxu0 0.0
    %802 = vmatpush1.msra.mxu0 0.0
    %803 = vmatprep.subr.mxu0 0.0
    %804 = vmatpush1.msra.mxu0 0.0
    %805 = vmatprep.subr.mxu0 0.0
    %806 = vmatpush1.msra.mxu0 0.0
    %807 = vmatprep.subr.mxu0 0.0
    %808 = vmatpush1.msra.mxu0 0.0
    %809 = vmatprep.subr.mxu0 0.0
    %810 = vmatpush1.msra.mxu0 0.0
    %811 = vmatprep.subr.mxu0 0.0
    %812 = vmatpush1.msra.mxu0 0.0
    %813 = vmatprep.subr.mxu0 0.0
    %814 = vmatpush1.msra.mxu0 0.0
    %815 = vmatprep.subr.mxu0 0.0
    %816 = vmatpush1.msra.mxu0 0.0
    %817 = vmatprep.subr.mxu0 0.0
    %818 = vmatpush1.msra.mxu0 0.0
    %819 = vmatprep.subr.mxu0 0.0
    %820 = vmatpush1.msra.mxu0 0.0
    %821 = vmatprep.subr.mxu0 0.0
    %822 = vmatpush1.msra.mxu0 0.0
    %823 = vmatprep.subr.mxu0 0.0
    %824 = vmatpush1.msra.mxu0 0.0
    %825 = vmatprep.subr.mxu0 0.0
    %826 = vmatpush1.msra.mxu0 0.0
    %827 = vmatprep.subr.mxu0 0.0
    %828 = vmatpush1.msra.mxu0 0.0
    %829 = vmatprep.subr.mxu0 0.0
    %830 = vmatpush1.msra.mxu0 0.0
    %831 = vmatprep.subr.mxu0 0.0
    %832 = vmatpush1.msra.mxu0 0.0
    %833 = vmatprep.mubr.f32.mxu0 0.0
    %834 = vmatmul.mubr.f32.gmra.mrb[0].mxu0 %v767
    %v835 = vpop.f32.mrb[0].mxu0
    %v836 = vadd.f32 0.0, %v835
    %v837 = vpop.f32.mrb[0].mxu0
    %838 = vdwg.mxu0
    %v840 = vsel %vm56, %v337, 0
    %842 = vmatprep.subr.mxu0 0.0
    %843 = vmatpush1.msra.mxu0 %v54
    %844 = vmatprep.subr.mxu0 0.0
    %845 = vmatpush1.msra.mxu0 %v55
    %846 = vmatprep.subr.mxu0 0.0
    %847 = vmatpush1.msra.mxu0 0.0
    %848 = vmatprep.subr.mxu0 0.0
    %849 = vmatpush1.msra.mxu0 0.0
    %850 = vmatprep.subr.mxu0 0.0
    %851 = vmatpush1.msra.mxu0 0.0
    %852 = vmatprep.subr.mxu0 0.0
    %853 = vmatpush1.msra.mxu0 0.0
    %854 = vmatprep.subr.mxu0 0.0
    %855 = vmatpush1.msra.mxu0 0.0
    %856 = vmatprep.subr.mxu0 0.0
    %857 = vmatpush1.msra.mxu0 0.0
    %858 = vmatprep.subr.mxu0 0.0
    %859 = vmatpush1.msra.mxu0 0.0
    %860 = vmatprep.subr.mxu0 0.0
    %861 = vmatpush1.msra.mxu0 0.0
    %862 = vmatprep.subr.mxu0 0.0
    %863 = vmatpush1.msra.mxu0 0.0
    %864 = vmatprep.subr.mxu0 0.0
    %865 = vmatpush1.msra.mxu0 0.0
    %866 = vmatprep.subr.mxu0 0.0
    %867 = vmatpush1.msra.mxu0 0.0
    %868 = vmatprep.subr.mxu0 0.0
    %869 = vmatpush1.msra.mxu0 0.0
    %870 = vmatprep.subr.mxu0 0.0
    %871 = vmatpush1.msra.mxu0 0.0
    %872 = vmatprep.subr.mxu0 0.0
    %873 = vmatpush1.msra.mxu0 0.0
    %874 = vmatprep.subr.mxu0 0.0
    %875 = vmatpush1.msra.mxu0 0.0
    %876 = vmatprep.subr.mxu0 0.0
    %877 = vmatpush1.msra.mxu0 0.0
    %878 = vmatprep.subr.mxu0 0.0
    %879 = vmatpush1.msra.mxu0 0.0
    %880 = vmatprep.subr.mxu0 0.0
    %881 = vmatpush1.msra.mxu0 0.0
    %882 = vmatprep.subr.mxu0 0.0
    %883 = vmatpush1.msra.mxu0 0.0
    %884 = vmatprep.subr.mxu0 0.0
    %885 = vmatpush1.msra.mxu0 0.0
    %886 = vmatprep.subr.mxu0 0.0
    %887 = vmatpush1.msra.mxu0 0.0
    %888 = vmatprep.subr.mxu0 0.0
    %889 = vmatpush1.msra.mxu0 0.0
    %890 = vmatprep.subr.mxu0 0.0
    %891 = vmatpush1.msra.mxu0 0.0
    %892 = vmatprep.subr.mxu0 0.0
    %893 = vmatpush1.msra.mxu0 0.0
    %894 = vmatprep.subr.mxu0 0.0
    %895 = vmatpush1.msra.mxu0 0.0
    %896 = vmatprep.subr.mxu0 0.0
    %897 = vmatpush1.msra.mxu0 0.0
    %898 = vmatprep.subr.mxu0 0.0
    %899 = vmatpush1.msra.mxu0 0.0
    %900 = vmatprep.subr.mxu0 0.0
    %901 = vmatpush1.msra.mxu0 0.0
    %902 = vmatprep.subr.mxu0 0.0
    %903 = vmatpush1.msra.mxu0 0.0
    %904 = vmatprep.subr.mxu0 0.0
    %905 = vmatpush1.msra.mxu0 0.0
    %906 = vmatprep.mubr.f32.mxu0 0.0
    %907 = vmatmul.mubr.f32.gmra.mrb[0].mxu0 %v840
    %v908 = vpop.f32.mrb[0].mxu0
    %v909 = vadd.f32 0.0, %v908
    %v910 = vpop.f32.mrb[0].mxu0
    %911 = vdwg.mxu0
    %v913 = vsel %vm56, %v407, 0
    %915 = vmatprep.subr.mxu0 0.0
    %916 = vmatpush1.msra.mxu0 %v54
    %917 = vmatprep.subr.mxu0 0.0
    %918 = vmatpush1.msra.mxu0 %v55
    %919 = vmatprep.subr.mxu0 0.0
    %920 = vmatpush1.msra.mxu0 0.0
    %921 = vmatprep.subr.mxu0 0.0
    %922 = vmatpush1.msra.mxu0 0.0
    %923 = vmatprep.subr.mxu0 0.0
    %924 = vmatpush1.msra.mxu0 0.0
    %925 = vmatprep.subr.mxu0 0.0
    %926 = vmatpush1.msra.mxu0 0.0
    %927 = vmatprep.subr.mxu0 0.0
    %928 = vmatpush1.msra.mxu0 0.0
    %929 = vmatprep.subr.mxu0 0.0
    %930 = vmatpush1.msra.mxu0 0.0
    %931 = vmatprep.subr.mxu0 0.0
    %932 = vmatpush1.msra.mxu0 0.0
    %933 = vmatprep.subr.mxu0 0.0
    %934 = vmatpush1.msra.mxu0 0.0
    %935 = vmatprep.subr.mxu0 0.0
    %936 = vmatpush1.msra.mxu0 0.0
    %937 = vmatprep.subr.mxu0 0.0
    %938 = vmatpush1.msra.mxu0 0.0
    %939 = vmatprep.subr.mxu0 0.0
    %940 = vmatpush1.msra.mxu0 0.0
    %941 = vmatprep.subr.mxu0 0.0
    %942 = vmatpush1.msra.mxu0 0.0
    %943 = vmatprep.subr.mxu0 0.0
    %944 = vmatpush1.msra.mxu0 0.0
    %945 = vmatprep.subr.mxu0 0.0
    %946 = vmatpush1.msra.mxu0 0.0
    %947 = vmatprep.subr.mxu0 0.0
    %948 = vmatpush1.msra.mxu0 0.0
    %949 = vmatprep.subr.mxu0 0.0
    %950 = vmatpush1.msra.mxu0 0.0
    %951 = vmatprep.subr.mxu0 0.0
    %952 = vmatpush1.msra.mxu0 0.0
    %953 = vmatprep.subr.mxu0 0.0
    %954 = vmatpush1.msra.mxu0 0.0
    %955 = vmatprep.subr.mxu0 0.0
    %956 = vmatpush1.msra.mxu0 0.0
    %957 = vmatprep.subr.mxu0 0.0
    %958 = vmatpush1.msra.mxu0 0.0
    %959 = vmatprep.subr.mxu0 0.0
    %960 = vmatpush1.msra.mxu0 0.0
    %961 = vmatprep.subr.mxu0 0.0
    %962 = vmatpush1.msra.mxu0 0.0
    %963 = vmatprep.subr.mxu0 0.0
    %964 = vmatpush1.msra.mxu0 0.0
    %965 = vmatprep.subr.mxu0 0.0
    %966 = vmatpush1.msra.mxu0 0.0
    %967 = vmatprep.subr.mxu0 0.0
    %968 = vmatpush1.msra.mxu0 0.0
    %969 = vmatprep.subr.mxu0 0.0
    %970 = vmatpush1.msra.mxu0 0.0
    %971 = vmatprep.subr.mxu0 0.0
    %972 = vmatpush1.msra.mxu0 0.0
    %973 = vmatprep.subr.mxu0 0.0
    %974 = vmatpush1.msra.mxu0 0.0
    %975 = vmatprep.subr.mxu0 0.0
    %976 = vmatpush1.msra.mxu0 0.0
    %977 = vmatprep.subr.mxu0 0.0
    %978 = vmatpush1.msra.mxu0 0.0
    %979 = vmatprep.mubr.f32.mxu0 0.0
    %980 = vmatmul.mubr.f32.gmra.mrb[0].mxu0 %v913
    %v981 = vpop.f32.mrb[0].mxu0
    %v982 = vadd.f32 0.0, %v981
    %v983 = vpop.f32.mrb[0].mxu0
    %984 = vdwg.mxu0
    %v986 = vsel %vm56, %v477, 0
    %988 = vmatprep.subr.mxu0 0.0
    %989 = vmatpush1.msra.mxu0 %v54
    %990 = vmatprep.subr.mxu0 0.0
    %991 = vmatpush1.msra.mxu0 %v55
    %992 = vmatprep.subr.mxu0 0.0
    %993 = vmatpush1.msra.mxu0 0.0
    %994 = vmatprep.subr.mxu0 0.0
    %995 = vmatpush1.msra.mxu0 0.0
    %996 = vmatprep.subr.mxu0 0.0
    %997 = vmatpush1.msra.mxu0 0.0
    %998 = vmatprep.subr.mxu0 0.0
    %999 = vmatpush1.msra.mxu0 0.0
    %1000 = vmatprep.subr.mxu0 0.0
    %1001 = vmatpush1.msra.mxu0 0.0
    %1002 = vmatprep.subr.mxu0 0.0
    %1003 = vmatpush1.msra.mxu0 0.0
    %1004 = vmatprep.subr.mxu0 0.0
    %1005 = vmatpush1.msra.mxu0 0.0
    %1006 = vmatprep.subr.mxu0 0.0
    %1007 = vmatpush1.msra.mxu0 0.0
    %1008 = vmatprep.subr.mxu0 0.0
    %1009 = vmatpush1.msra.mxu0 0.0
    %1010 = vmatprep.subr.mxu0 0.0
    %1011 = vmatpush1.msra.mxu0 0.0
    %1012 = vmatprep.subr.mxu0 0.0
    %1013 = vmatpush1.msra.mxu0 0.0
    %1014 = vmatprep.subr.mxu0 0.0
    %1015 = vmatpush1.msra.mxu0 0.0
    %1016 = vmatprep.subr.mxu0 0.0
    %1017 = vmatpush1.msra.mxu0 0.0
    %1018 = vmatprep.subr.mxu0 0.0
    %1019 = vmatpush1.msra.mxu0 0.0
    %1020 = vmatprep.subr.mxu0 0.0
    %1021 = vmatpush1.msra.mxu0 0.0
    %1022 = vmatprep.subr.mxu0 0.0
    %1023 = vmatpush1.msra.mxu0 0.0
    %1024 = vmatprep.subr.mxu0 0.0
    %1025 = vmatpush1.msra.mxu0 0.0
    %1026 = vmatprep.subr.mxu0 0.0
    %1027 = vmatpush1.msra.mxu0 0.0
    %1028 = vmatprep.subr.mxu0 0.0
    %1029 = vmatpush1.msra.mxu0 0.0
    %1030 = vmatprep.subr.mxu0 0.0
    %1031 = vmatpush1.msra.mxu0 0.0
    %1032 = vmatprep.subr.mxu0 0.0
    %1033 = vmatpush1.msra.mxu0 0.0
    %1034 = vmatprep.subr.mxu0 0.0
    %1035 = vmatpush1.msra.mxu0 0.0
    %1036 = vmatprep.subr.mxu0 0.0
    %1037 = vmatpush1.msra.mxu0 0.0
    %1038 = vmatprep.subr.mxu0 0.0
    %1039 = vmatpush1.msra.mxu0 0.0
    %1040 = vmatprep.subr.mxu0 0.0
    %1041 = vmatpush1.msra.mxu0 0.0
    %1042 = vmatprep.subr.mxu0 0.0
    %1043 = vmatpush1.msra.mxu0 0.0
    %1044 = vmatprep.subr.mxu0 0.0
    %1045 = vmatpush1.msra.mxu0 0.0
    %1046 = vmatprep.subr.mxu0 0.0
    %1047 = vmatpush1.msra.mxu0 0.0
    %1048 = vmatprep.subr.mxu0 0.0
    %1049 = vmatpush1.msra.mxu0 0.0
    %1050 = vmatprep.subr.mxu0 0.0
    %1051 = vmatpush1.msra.mxu0 0.0
    %1052 = vmatprep.mubr.f32.mxu0 0.0
    %1053 = vmatmul.mubr.f32.gmra.mrb[0].mxu0 %v986
    %v1054 = vpop.f32.mrb[0].mxu0
    %v1055 = vadd.f32 0.0, %v1054
    %v1056 = vpop.f32.mrb[0].mxu0
    %1057 = vdwg.mxu0
    %v1059 = vsel %vm56, %v547, 0
    %1061 = vmatprep.subr.mxu0 0.0
    %1062 = vmatpush1.msra.mxu0 %v54
    %1063 = vmatprep.subr.mxu0 0.0
    %1064 = vmatpush1.msra.mxu0 %v55
    %1065 = vmatprep.subr.mxu0 0.0
    %1066 = vmatpush1.msra.mxu0 0.0
    %1067 = vmatprep.subr.mxu0 0.0
    %1068 = vmatpush1.msra.mxu0 0.0
    %1069 = vmatprep.subr.mxu0 0.0
    %1070 = vmatpush1.msra.mxu0 0.0
    %1071 = vmatprep.subr.mxu0 0.0
    %1072 = vmatpush1.msra.mxu0 0.0
    %1073 = vmatprep.subr.mxu0 0.0
    %1074 = vmatpush1.msra.mxu0 0.0
    %1075 = vmatprep.subr.mxu0 0.0
    %1076 = vmatpush1.msra.mxu0 0.0
    %1077 = vmatprep.subr.mxu0 0.0
    %1078 = vmatpush1.msra.mxu0 0.0
    %1079 = vmatprep.subr.mxu0 0.0
    %1080 = vmatpush1.msra.mxu0 0.0
    %1081 = vmatprep.subr.mxu0 0.0
    %1082 = vmatpush1.msra.mxu0 0.0
    %1083 = vmatprep.subr.mxu0 0.0
    %1084 = vmatpush1.msra.mxu0 0.0
    %1085 = vmatprep.subr.mxu0 0.0
    %1086 = vmatpush1.msra.mxu0 0.0
    %1087 = vmatprep.subr.mxu0 0.0
    %1088 = vmatpush1.msra.mxu0 0.0
    %1089 = vmatprep.subr.mxu0 0.0
    %1090 = vmatpush1.msra.mxu0 0.0
    %1091 = vmatprep.subr.mxu0 0.0
    %1092 = vmatpush1.msra.mxu0 0.0
    %1093 = vmatprep.subr.mxu0 0.0
    %1094 = vmatpush1.msra.mxu0 0.0
    %1095 = vmatprep.subr.mxu0 0.0
    %1096 = vmatpush1.msra.mxu0 0.0
    %1097 = vmatprep.subr.mxu0 0.0
    %1098 = vmatpush1.msra.mxu0 0.0
    %1099 = vmatprep.subr.mxu0 0.0
    %1100 = vmatpush1.msra.mxu0 0.0
    %1101 = vmatprep.subr.mxu0 0.0
    %1102 = vmatpush1.msra.mxu0 0.0
    %1103 = vmatprep.subr.mxu0 0.0
    %1104 = vmatpush1.msra.mxu0 0.0
    %1105 = vmatprep.subr.mxu0 0.0
    %1106 = vmatpush1.msra.mxu0 0.0
    %1107 = vmatprep.subr.mxu0 0.0
    %1108 = vmatpush1.msra.mxu0 0.0
    %1109 = vmatprep.subr.mxu0 0.0
    %1110 = vmatpush1.msra.mxu0 0.0
    %1111 = vmatprep.subr.mxu0 0.0
    %1112 = vmatpush1.msra.mxu0 0.0
    %1113 = vmatprep.subr.mxu0 0.0
    %1114 = vmatpush1.msra.mxu0 0.0
    %1115 = vmatprep.subr.mxu0 0.0
    %1116 = vmatpush1.msra.mxu0 0.0
    %1117 = vmatprep.subr.mxu0 0.0
    %1118 = vmatpush1.msra.mxu0 0.0
    %1119 = vmatprep.subr.mxu0 0.0
    %1120 = vmatpush1.msra.mxu0 0.0
    %1121 = vmatprep.subr.mxu0 0.0
    %1122 = vmatpush1.msra.mxu0 0.0
    %1123 = vmatprep.subr.mxu0 0.0
    %1124 = vmatpush1.msra.mxu0 0.0
    %1125 = vmatprep.mubr.f32.mxu0 0.0
    %1126 = vmatmul.mubr.f32.gmra.mrb[0].mxu0 %v1059
    %v1127 = vpop.f32.mrb[0].mxu0
    %v1128 = vadd.f32 0.0, %v1127
    %v1129 = vpop.f32.mrb[0].mxu0
    %1130 = vdwg.mxu0
    %v1132 = vsel %vm56, %v617, 0
    %1134 = vmatprep.subr.mxu0 0.0
    %1135 = vmatpush1.msra.mxu0 %v54
    %1136 = vmatprep.subr.mxu0 0.0
    %1137 = vmatpush1.msra.mxu0 %v55
    %1138 = vmatprep.subr.mxu0 0.0
    %1139 = vmatpush1.msra.mxu0 0.0
    %1140 = vmatprep.subr.mxu0 0.0
    %1141 = vmatpush1.msra.mxu0 0.0
    %1142 = vmatprep.subr.mxu0 0.0
    %1143 = vmatpush1.msra.mxu0 0.0
    %1144 = vmatprep.subr.mxu0 0.0
    %1145 = vmatpush1.msra.mxu0 0.0
    %1146 = vmatprep.subr.mxu0 0.0
    %1147 = vmatpush1.msra.mxu0 0.0
    %1148 = vmatprep.subr.mxu0 0.0
    %1149 = vmatpush1.msra.mxu0 0.0
    %1150 = vmatprep.subr.mxu0 0.0
    %1151 = vmatpush1.msra.mxu0 0.0
    %1152 = vmatprep.subr.mxu0 0.0
    %1153 = vmatpush1.msra.mxu0 0.0
    %1154 = vmatprep.subr.mxu0 0.0
    %1155 = vmatpush1.msra.mxu0 0.0
    %1156 = vmatprep.subr.mxu0 0.0
    %1157 = vmatpush1.msra.mxu0 0.0
    %1158 = vmatprep.subr.mxu0 0.0
    %1159 = vmatpush1.msra.mxu0 0.0
    %1160 = vmatprep.subr.mxu0 0.0
    %1161 = vmatpush1.msra.mxu0 0.0
    %1162 = vmatprep.subr.mxu0 0.0
    %1163 = vmatpush1.msra.mxu0 0.0
    %1164 = vmatprep.subr.mxu0 0.0
    %1165 = vmatpush1.msra.mxu0 0.0
    %1166 = vmatprep.subr.mxu0 0.0
    %1167 = vmatpush1.msra.mxu0 0.0
    %1168 = vmatprep.subr.mxu0 0.0
    %1169 = vmatpush1.msra.mxu0 0.0
    %1170 = vmatprep.subr.mxu0 0.0
    %1171 = vmatpush1.msra.mxu0 0.0
    %1172 = vmatprep.subr.mxu0 0.0
    %1173 = vmatpush1.msra.mxu0 0.0
    %1174 = vmatprep.subr.mxu0 0.0
    %1175 = vmatpush1.msra.mxu0 0.0
    %1176 = vmatprep.subr.mxu0 0.0
    %1177 = vmatpush1.msra.mxu0 0.0
    %1178 = vmatprep.subr.mxu0 0.0
    %1179 = vmatpush1.msra.mxu0 0.0
    %1180 = vmatprep.subr.mxu0 0.0
    %1181 = vmatpush1.msra.mxu0 0.0
    %1182 = vmatprep.subr.mxu0 0.0
    %1183 = vmatpush1.msra.mxu0 0.0
    %1184 = vmatprep.subr.mxu0 0.0
    %1185 = vmatpush1.msra.mxu0 0.0
    %1186 = vmatprep.subr.mxu0 0.0
    %1187 = vmatpush1.msra.mxu0 0.0
    %1188 = vmatprep.subr.mxu0 0.0
    %1189 = vmatpush1.msra.mxu0 0.0
    %1190 = vmatprep.subr.mxu0 0.0
    %1191 = vmatpush1.msra.mxu0 0.0
    %1192 = vmatprep.subr.mxu0 0.0
    %1193 = vmatpush1.msra.mxu0 0.0
    %1194 = vmatprep.subr.mxu0 0.0
    %1195 = vmatpush1.msra.mxu0 0.0
    %1196 = vmatprep.subr.mxu0 0.0
    %1197 = vmatpush1.msra.mxu0 0.0
    %1198 = vmatprep.mubr.f32.mxu0 0.0
    %1199 = vmatmul.mubr.f32.gmra.mrb[0].mxu0 %v1132
    %v1200 = vpop.f32.mrb[0].mxu0
    %v1201 = vadd.f32 0.0, %v1200
    %v1202 = vpop.f32.mrb[0].mxu0
    %1203 = vdwg.mxu0
    %vm1204 = vcmask 64512
    %1205 = vst.msk [vmem:[#allocation5] sm:$0xff] %vm1204, %v690
    %1206 = vst.msk [vmem:[#allocation5 + $0x8] sm:$0xff] %vm1204, %v763
    %1207 = vst.msk [vmem:[#allocation5 + $0x10] sm:$0xff] %vm1204, %v836
    %1208 = vst.msk [vmem:[#allocation5 + $0x18] sm:$0xff] %vm1204, %v909
    %1209 = vst.msk [vmem:[#allocation5 + $0x20] sm:$0xff] %vm1204, %v982
    %1210 = vst.msk [vmem:[#allocation5 + $0x28] sm:$0xff] %vm1204, %v1055
    %1211 = vst.msk [vmem:[#allocation5 + $0x30] sm:$0xff] %vm1204, %v1128
    %1212 = vst.msk [vmem:[#allocation5 + $0x38] sm:$0xff] %vm1204, %v1201
    %v1213 = vld [vmem:[%s3] sm:$0xf]
    %v1214 = vld [vmem:[%s4] sm:$0xff]
    %v1215 = vld [vmem:[%s4 + $0x8] sm:$0xff]
    %v1217 = vsel %vm56, %v1213, 0
    %1219 = vmatprep.subr.mxu0 0.0
    %1220 = vmatpush1.msra.mxu0 %v37
    %1221 = vmatprep.subr.mxu0 0.0
    %1222 = vmatpush1.msra.mxu0 %v38
    %1223 = vmatprep.subr.mxu0 0.0
    %1224 = vmatpush1.msra.mxu0 0.0
    %1225 = vmatprep.subr.mxu0 0.0
    %1226 = vmatpush1.msra.mxu0 0.0
    %1227 = vmatprep.subr.mxu0 0.0
    %1228 = vmatpush1.msra.mxu0 0.0
    %1229 = vmatprep.subr.mxu0 0.0
    %1230 = vmatpush1.msra.mxu0 0.0
    %1231 = vmatprep.subr.mxu0 0.0
    %1232 = vmatpush1.msra.mxu0 0.0
    %1233 = vmatprep.subr.mxu0 0.0
    %1234 = vmatpush1.msra.mxu0 0.0
    %1235 = vmatprep.subr.mxu0 0.0
    %1236 = vmatpush1.msra.mxu0 0.0
    %1237 = vmatprep.subr.mxu0 0.0
    %1238 = vmatpush1.msra.mxu0 0.0
    %1239 = vmatprep.subr.mxu0 0.0
    %1240 = vmatpush1.msra.mxu0 0.0
    %1241 = vmatprep.subr.mxu0 0.0
    %1242 = vmatpush1.msra.mxu0 0.0
    %1243 = vmatprep.subr.mxu0 0.0
    %1244 = vmatpush1.msra.mxu0 0.0
    %1245 = vmatprep.subr.mxu0 0.0
    %1246 = vmatpush1.msra.mxu0 0.0
    %1247 = vmatprep.subr.mxu0 0.0
    %1248 = vmatpush1.msra.mxu0 0.0
    %1249 = vmatprep.subr.mxu0 0.0
    %1250 = vmatpush1.msra.mxu0 0.0
    %1251 = vmatprep.subr.mxu0 0.0
    %1252 = vmatpush1.msra.mxu0 0.0
    %1253 = vmatprep.subr.mxu0 0.0
    %1254 = vmatpush1.msra.mxu0 0.0
    %1255 = vmatprep.subr.mxu0 0.0
    %1256 = vmatpush1.msra.mxu0 0.0
    %1257 = vmatprep.subr.mxu0 0.0
    %1258 = vmatpush1.msra.mxu0 0.0
    %1259 = vmatprep.subr.mxu0 0.0
    %1260 = vmatpush1.msra.mxu0 0.0
    %1261 = vmatprep.subr.mxu0 0.0
    %1262 = vmatpush1.msra.mxu0 0.0
    %1263 = vmatprep.subr.mxu0 0.0
    %1264 = vmatpush1.msra.mxu0 0.0
    %1265 = vmatprep.subr.mxu0 0.0
    %1266 = vmatpush1.msra.mxu0 0.0
    %1267 = vmatprep.subr.mxu0 0.0
    %1268 = vmatpush1.msra.mxu0 0.0
    %1269 = vmatprep.subr.mxu0 0.0
    %1270 = vmatpush1.msra.mxu0 0.0
    %1271 = vmatprep.subr.mxu0 0.0
    %1272 = vmatpush1.msra.mxu0 0.0
    %1273 = vmatprep.subr.mxu0 0.0
    %1274 = vmatpush1.msra.mxu0 0.0
    %1275 = vmatprep.subr.mxu0 0.0
    %1276 = vmatpush1.msra.mxu0 0.0
    %1277 = vmatprep.subr.mxu0 0.0
    %1278 = vmatpush1.msra.mxu0 0.0
    %1279 = vmatprep.subr.mxu0 0.0
    %1280 = vmatpush1.msra.mxu0 0.0
    %1281 = vmatprep.subr.mxu0 0.0
    %1282 = vmatpush1.msra.mxu0 0.0
    %1283 = vmatprep.mubr.f32.mxu0 0.0
    %1284 = vmatmul.mubr.f32.gmra.mrb[0].mxu0 %v1217
    %v1285 = vpop.f32.mrb[0].mxu0
    %v1286 = vadd.f32 0.0, %v1285
    %v1287 = vpop.f32.mrb[0].mxu0
    %1288 = vdwg.mxu0
    %1289 = vmatprep.subr.mxu0 0.0
    %1290 = vmatpush1.msra.mxu0 %v39
    %1291 = vmatprep.subr.mxu0 0.0
    %1292 = vmatpush1.msra.mxu0 %v40
    %1293 = vmatprep.subr.mxu0 0.0
    %1294 = vmatpush1.msra.mxu0 0.0
    %1295 = vmatprep.subr.mxu0 0.0
    %1296 = vmatpush1.msra.mxu0 0.0
    %1297 = vmatprep.subr.mxu0 0.0
    %1298 = vmatpush1.msra.mxu0 0.0
    %1299 = vmatprep.subr.mxu0 0.0
    %1300 = vmatpush1.msra.mxu0 0.0
    %1301 = vmatprep.subr.mxu0 0.0
    %1302 = vmatpush1.msra.mxu0 0.0
    %1303 = vmatprep.subr.mxu0 0.0
    %1304 = vmatpush1.msra.mxu0 0.0
    %1305 = vmatprep.subr.mxu0 0.0
    %1306 = vmatpush1.msra.mxu0 0.0
    %1307 = vmatprep.subr.mxu0 0.0
    %1308 = vmatpush1.msra.mxu0 0.0
    %1309 = vmatprep.subr.mxu0 0.0
    %1310 = vmatpush1.msra.mxu0 0.0
    %1311 = vmatprep.subr.mxu0 0.0
    %1312 = vmatpush1.msra.mxu0 0.0
    %1313 = vmatprep.subr.mxu0 0.0
    %1314 = vmatpush1.msra.mxu0 0.0
    %1315 = vmatprep.subr.mxu0 0.0
    %1316 = vmatpush1.msra.mxu0 0.0
    %1317 = vmatprep.subr.mxu0 0.0
    %1318 = vmatpush1.msra.mxu0 0.0
    %1319 = vmatprep.subr.mxu0 0.0
    %1320 = vmatpush1.msra.mxu0 0.0
    %1321 = vmatprep.subr.mxu0 0.0
    %1322 = vmatpush1.msra.mxu0 0.0
    %1323 = vmatprep.subr.mxu0 0.0
    %1324 = vmatpush1.msra.mxu0 0.0
    %1325 = vmatprep.subr.mxu0 0.0
    %1326 = vmatpush1.msra.mxu0 0.0
    %1327 = vmatprep.subr.mxu0 0.0
    %1328 = vmatpush1.msra.mxu0 0.0
    %1329 = vmatprep.subr.mxu0 0.0
    %1330 = vmatpush1.msra.mxu0 0.0
    %1331 = vmatprep.subr.mxu0 0.0
    %1332 = vmatpush1.msra.mxu0 0.0
    %1333 = vmatprep.subr.mxu0 0.0
    %1334 = vmatpush1.msra.mxu0 0.0
    %1335 = vmatprep.subr.mxu0 0.0
    %1336 = vmatpush1.msra.mxu0 0.0
    %1337 = vmatprep.subr.mxu0 0.0
    %1338 = vmatpush1.msra.mxu0 0.0
    %1339 = vmatprep.subr.mxu0 0.0
    %1340 = vmatpush1.msra.mxu0 0.0
    %1341 = vmatprep.subr.mxu0 0.0
    %1342 = vmatpush1.msra.mxu0 0.0
    %1343 = vmatprep.subr.mxu0 0.0
    %1344 = vmatpush1.msra.mxu0 0.0
    %1345 = vmatprep.subr.mxu0 0.0
    %1346 = vmatpush1.msra.mxu0 0.0
    %1347 = vmatprep.subr.mxu0 0.0
    %1348 = vmatpush1.msra.mxu0 0.0
    %1349 = vmatprep.subr.mxu0 0.0
    %1350 = vmatpush1.msra.mxu0 0.0
    %1351 = vmatprep.subr.mxu0 0.0
    %1352 = vmatpush1.msra.mxu0 0.0
    %1353 = vmatprep.mubr.f32.mxu0 0.0
    %1354 = vmatmul.mubr.f32.gmra.mrb[0].mxu0 %v1217
    %v1355 = vpop.f32.mrb[0].mxu0
    %v1356 = vadd.f32 0.0, %v1355
    %v1357 = vpop.f32.mrb[0].mxu0
    %1358 = vdwg.mxu0
    %1359 = vmatprep.subr.mxu0 0.0
    %1360 = vmatpush1.msra.mxu0 %v41
    %1361 = vmatprep.subr.mxu0 0.0
    %1362 = vmatpush1.msra.mxu0 %v42
    %1363 = vmatprep.subr.mxu0 0.0
    %1364 = vmatpush1.msra.mxu0 0.0
    %1365 = vmatprep.subr.mxu0 0.0
    %1366 = vmatpush1.msra.mxu0 0.0
    %1367 = vmatprep.subr.mxu0 0.0
    %1368 = vmatpush1.msra.mxu0 0.0
    %1369 = vmatprep.subr.mxu0 0.0
    %1370 = vmatpush1.msra.mxu0 0.0
    %1371 = vmatprep.subr.mxu0 0.0
    %1372 = vmatpush1.msra.mxu0 0.0
    %1373 = vmatprep.subr.mxu0 0.0
    %1374 = vmatpush1.msra.mxu0 0.0
    %1375 = vmatprep.subr.mxu0 0.0
    %1376 = vmatpush1.msra.mxu0 0.0
    %1377 = vmatprep.subr.mxu0 0.0
    %1378 = vmatpush1.msra.mxu0 0.0
    %1379 = vmatprep.subr.mxu0 0.0
    %1380 = vmatpush1.msra.mxu0 0.0
    %1381 = vmatprep.subr.mxu0 0.0
    %1382 = vmatpush1.msra.mxu0 0.0
    %1383 = vmatprep.subr.mxu0 0.0
    %1384 = vmatpush1.msra.mxu0 0.0
    %1385 = vmatprep.subr.mxu0 0.0
    %1386 = vmatpush1.msra.mxu0 0.0
    %1387 = vmatprep.subr.mxu0 0.0
    %1388 = vmatpush1.msra.mxu0 0.0
    %1389 = vmatprep.subr.mxu0 0.0
    %1390 = vmatpush1.msra.mxu0 0.0
    %1391 = vmatprep.subr.mxu0 0.0
    %1392 = vmatpush1.msra.mxu0 0.0
    %1393 = vmatprep.subr.mxu0 0.0
    %1394 = vmatpush1.msra.mxu0 0.0
    %1395 = vmatprep.subr.mxu0 0.0
    %1396 = vmatpush1.msra.mxu0 0.0
    %1397 = vmatprep.subr.mxu0 0.0
    %1398 = vmatpush1.msra.mxu0 0.0
    %1399 = vmatprep.subr.mxu0 0.0
    %1400 = vmatpush1.msra.mxu0 0.0
    %1401 = vmatprep.subr.mxu0 0.0
    %1402 = vmatpush1.msra.mxu0 0.0
    %1403 = vmatprep.subr.mxu0 0.0
    %1404 = vmatpush1.msra.mxu0 0.0
    %1405 = vmatprep.subr.mxu0 0.0
    %1406 = vmatpush1.msra.mxu0 0.0
    %1407 = vmatprep.subr.mxu0 0.0
    %1408 = vmatpush1.msra.mxu0 0.0
    %1409 = vmatprep.subr.mxu0 0.0
    %1410 = vmatpush1.msra.mxu0 0.0
    %1411 = vmatprep.subr.mxu0 0.0
    %1412 = vmatpush1.msra.mxu0 0.0
    %1413 = vmatprep.subr.mxu0 0.0
    %1414 = vmatpush1.msra.mxu0 0.0
    %1415 = vmatprep.subr.mxu0 0.0
    %1416 = vmatpush1.msra.mxu0 0.0
    %1417 = vmatprep.subr.mxu0 0.0
    %1418 = vmatpush1.msra.mxu0 0.0
    %1419 = vmatprep.subr.mxu0 0.0
    %1420 = vmatpush1.msra.mxu0 0.0
    %1421 = vmatprep.subr.mxu0 0.0
    %1422 = vmatpush1.msra.mxu0 0.0
    %1423 = vmatprep.mubr.f32.mxu0 0.0
    %1424 = vmatmul.mubr.f32.gmra.mrb[0].mxu0 %v1217
    %v1425 = vpop.f32.mrb[0].mxu0
    %v1426 = vadd.f32 0.0, %v1425
    %v1427 = vpop.f32.mrb[0].mxu0
    %1428 = vdwg.mxu0
    %1429 = vmatprep.subr.mxu0 0.0
    %1430 = vmatpush1.msra.mxu0 %v43
    %1431 = vmatprep.subr.mxu0 0.0
    %1432 = vmatpush1.msra.mxu0 %v44
    %1433 = vmatprep.subr.mxu0 0.0
    %1434 = vmatpush1.msra.mxu0 0.0
    %1435 = vmatprep.subr.mxu0 0.0
    %1436 = vmatpush1.msra.mxu0 0.0
    %1437 = vmatprep.subr.mxu0 0.0
    %1438 = vmatpush1.msra.mxu0 0.0
    %1439 = vmatprep.subr.mxu0 0.0
    %1440 = vmatpush1.msra.mxu0 0.0
    %1441 = vmatprep.subr.mxu0 0.0
    %1442 = vmatpush1.msra.mxu0 0.0
    %1443 = vmatprep.subr.mxu0 0.0
    %1444 = vmatpush1.msra.mxu0 0.0
    %1445 = vmatprep.subr.mxu0 0.0
    %1446 = vmatpush1.msra.mxu0 0.0
    %1447 = vmatprep.subr.mxu0 0.0
    %1448 = vmatpush1.msra.mxu0 0.0
    %1449 = vmatprep.subr.mxu0 0.0
    %1450 = vmatpush1.msra.mxu0 0.0
    %1451 = vmatprep.subr.mxu0 0.0
    %1452 = vmatpush1.msra.mxu0 0.0
    %1453 = vmatprep.subr.mxu0 0.0
    %1454 = vmatpush1.msra.mxu0 0.0
    %1455 = vmatprep.subr.mxu0 0.0
    %1456 = vmatpush1.msra.mxu0 0.0
    %1457 = vmatprep.subr.mxu0 0.0
    %1458 = vmatpush1.msra.mxu0 0.0
    %1459 = vmatprep.subr.mxu0 0.0
    %1460 = vmatpush1.msra.mxu0 0.0
    %1461 = vmatprep.subr.mxu0 0.0
    %1462 = vmatpush1.msra.mxu0 0.0
    %1463 = vmatprep.subr.mxu0 0.0
    %1464 = vmatpush1.msra.mxu0 0.0
    %1465 = vmatprep.subr.mxu0 0.0
    %1466 = vmatpush1.msra.mxu0 0.0
    %1467 = vmatprep.subr.mxu0 0.0
    %1468 = vmatpush1.msra.mxu0 0.0
    %1469 = vmatprep.subr.mxu0 0.0
    %1470 = vmatpush1.msra.mxu0 0.0
    %1471 = vmatprep.subr.mxu0 0.0
    %1472 = vmatpush1.msra.mxu0 0.0
    %1473 = vmatprep.subr.mxu0 0.0
    %1474 = vmatpush1.msra.mxu0 0.0
    %1475 = vmatprep.subr.mxu0 0.0
    %1476 = vmatpush1.msra.mxu0 0.0
    %1477 = vmatprep.subr.mxu0 0.0
    %1478 = vmatpush1.msra.mxu0 0.0
    %1479 = vmatprep.subr.mxu0 0.0
    %1480 = vmatpush1.msra.mxu0 0.0
    %1481 = vmatprep.subr.mxu0 0.0
    %1482 = vmatpush1.msra.mxu0 0.0
    %1483 = vmatprep.subr.mxu0 0.0
    %1484 = vmatpush1.msra.mxu0 0.0
    %1485 = vmatprep.subr.mxu0 0.0
    %1486 = vmatpush1.msra.mxu0 0.0
    %1487 = vmatprep.subr.mxu0 0.0
    %1488 = vmatpush1.msra.mxu0 0.0
    %1489 = vmatprep.subr.mxu0 0.0
    %1490 = vmatpush1.msra.mxu0 0.0
    %1491 = vmatprep.subr.mxu0 0.0
    %1492 = vmatpush1.msra.mxu0 0.0
    %1493 = vmatprep.mubr.f32.mxu0 0.0
    %1494 = vmatmul.mubr.f32.gmra.mrb[0].mxu0 %v1217
    %v1495 = vpop.f32.mrb[0].mxu0
    %v1496 = vadd.f32 0.0, %v1495
    %v1497 = vpop.f32.mrb[0].mxu0
    %1498 = vdwg.mxu0
    %1499 = vmatprep.subr.mxu0 0.0
    %1500 = vmatpush1.msra.mxu0 %v45
    %1501 = vmatprep.subr.mxu0 0.0
    %1502 = vmatpush1.msra.mxu0 %v46
    %1503 = vmatprep.subr.mxu0 0.0
    %1504 = vmatpush1.msra.mxu0 0.0
    %1505 = vmatprep.subr.mxu0 0.0
    %1506 = vmatpush1.msra.mxu0 0.0
    %1507 = vmatprep.subr.mxu0 0.0
    %1508 = vmatpush1.msra.mxu0 0.0
    %1509 = vmatprep.subr.mxu0 0.0
    %1510 = vmatpush1.msra.mxu0 0.0
    %1511 = vmatprep.subr.mxu0 0.0
    %1512 = vmatpush1.msra.mxu0 0.0
    %1513 = vmatprep.subr.mxu0 0.0
    %1514 = vmatpush1.msra.mxu0 0.0
    %1515 = vmatprep.subr.mxu0 0.0
    %1516 = vmatpush1.msra.mxu0 0.0
    %1517 = vmatprep.subr.mxu0 0.0
    %1518 = vmatpush1.msra.mxu0 0.0
    %1519 = vmatprep.subr.mxu0 0.0
    %1520 = vmatpush1.msra.mxu0 0.0
    %1521 = vmatprep.subr.mxu0 0.0
    %1522 = vmatpush1.msra.mxu0 0.0
    %1523 = vmatprep.subr.mxu0 0.0
    %1524 = vmatpush1.msra.mxu0 0.0
    %1525 = vmatprep.subr.mxu0 0.0
    %1526 = vmatpush1.msra.mxu0 0.0
    %1527 = vmatprep.subr.mxu0 0.0
    %1528 = vmatpush1.msra.mxu0 0.0
    %1529 = vmatprep.subr.mxu0 0.0
    %1530 = vmatpush1.msra.mxu0 0.0
    %1531 = vmatprep.subr.mxu0 0.0
    %1532 = vmatpush1.msra.mxu0 0.0
    %1533 = vmatprep.subr.mxu0 0.0
    %1534 = vmatpush1.msra.mxu0 0.0
    %1535 = vmatprep.subr.mxu0 0.0
    %1536 = vmatpush1.msra.mxu0 0.0
    %1537 = vmatprep.subr.mxu0 0.0
    %1538 = vmatpush1.msra.mxu0 0.0
    %1539 = vmatprep.subr.mxu0 0.0
    %1540 = vmatpush1.msra.mxu0 0.0
    %1541 = vmatprep.subr.mxu0 0.0
    %1542 = vmatpush1.msra.mxu0 0.0
    %1543 = vmatprep.subr.mxu0 0.0
    %1544 = vmatpush1.msra.mxu0 0.0
    %1545 = vmatprep.subr.mxu0 0.0
    %1546 = vmatpush1.msra.mxu0 0.0
    %1547 = vmatprep.subr.mxu0 0.0
    %1548 = vmatpush1.msra.mxu0 0.0
    %1549 = vmatprep.subr.mxu0 0.0
    %1550 = vmatpush1.msra.mxu0 0.0
    %1551 = vmatprep.subr.mxu0 0.0
    %1552 = vmatpush1.msra.mxu0 0.0
    %1553 = vmatprep.subr.mxu0 0.0
    %1554 = vmatpush1.msra.mxu0 0.0
    %1555 = vmatprep.subr.mxu0 0.0
    %1556 = vmatpush1.msra.mxu0 0.0
    %1557 = vmatprep.subr.mxu0 0.0
    %1558 = vmatpush1.msra.mxu0 0.0
    %1559 = vmatprep.subr.mxu0 0.0
    %1560 = vmatpush1.msra.mxu0 0.0
    %1561 = vmatprep.subr.mxu0 0.0
    %1562 = vmatpush1.msra.mxu0 0.0
    %1563 = vmatprep.mubr.f32.mxu0 0.0
    %1564 = vmatmul.mubr.f32.gmra.mrb[0].mxu0 %v1217
    %v1565 = vpop.f32.mrb[0].mxu0
    %v1566 = vadd.f32 0.0, %v1565
    %v1567 = vpop.f32.mrb[0].mxu0
    %1568 = vdwg.mxu0
    %1569 = vmatprep.subr.mxu0 0.0
    %1570 = vmatpush1.msra.mxu0 %v47
    %1571 = vmatprep.subr.mxu0 0.0
    %1572 = vmatpush1.msra.mxu0 %v48
    %1573 = vmatprep.subr.mxu0 0.0
    %1574 = vmatpush1.msra.mxu0 0.0
    %1575 = vmatprep.subr.mxu0 0.0
    %1576 = vmatpush1.msra.mxu0 0.0
    %1577 = vmatprep.subr.mxu0 0.0
    %1578 = vmatpush1.msra.mxu0 0.0
    %1579 = vmatprep.subr.mxu0 0.0
    %1580 = vmatpush1.msra.mxu0 0.0
    %1581 = vmatprep.subr.mxu0 0.0
    %1582 = vmatpush1.msra.mxu0 0.0
    %1583 = vmatprep.subr.mxu0 0.0
    %1584 = vmatpush1.msra.mxu0 0.0
    %1585 = vmatprep.subr.mxu0 0.0
    %1586 = vmatpush1.msra.mxu0 0.0
    %1587 = vmatprep.subr.mxu0 0.0
    %1588 = vmatpush1.msra.mxu0 0.0
    %1589 = vmatprep.subr.mxu0 0.0
    %1590 = vmatpush1.msra.mxu0 0.0
    %1591 = vmatprep.subr.mxu0 0.0
    %1592 = vmatpush1.msra.mxu0 0.0
    %1593 = vmatprep.subr.mxu0 0.0
    %1594 = vmatpush1.msra.mxu0 0.0
    %1595 = vmatprep.subr.mxu0 0.0
    %1596 = vmatpush1.msra.mxu0 0.0
    %1597 = vmatprep.subr.mxu0 0.0
    %1598 = vmatpush1.msra.mxu0 0.0
    %1599 = vmatprep.subr.mxu0 0.0
    %1600 = vmatpush1.msra.mxu0 0.0
    %1601 = vmatprep.subr.mxu0 0.0
    %1602 = vmatpush1.msra.mxu0 0.0
    %1603 = vmatprep.subr.mxu0 0.0
    %1604 = vmatpush1.msra.mxu0 0.0
    %1605 = vmatprep.subr.mxu0 0.0
    %1606 = vmatpush1.msra.mxu0 0.0
    %1607 = vmatprep.subr.mxu0 0.0
    %1608 = vmatpush1.msra.mxu0 0.0
    %1609 = vmatprep.subr.mxu0 0.0
    %1610 = vmatpush1.msra.mxu0 0.0
    %1611 = vmatprep.subr.mxu0 0.0
    %1612 = vmatpush1.msra.mxu0 0.0
    %1613 = vmatprep.subr.mxu0 0.0
    %1614 = vmatpush1.msra.mxu0 0.0
    %1615 = vmatprep.subr.mxu0 0.0
    %1616 = vmatpush1.msra.mxu0 0.0
    %1617 = vmatprep.subr.mxu0 0.0
    %1618 = vmatpush1.msra.mxu0 0.0
    %1619 = vmatprep.subr.mxu0 0.0
    %1620 = vmatpush1.msra.mxu0 0.0
    %1621 = vmatprep.subr.mxu0 0.0
    %1622 = vmatpush1.msra.mxu0 0.0
    %1623 = vmatprep.subr.mxu0 0.0
    %1624 = vmatpush1.msra.mxu0 0.0
    %1625 = vmatprep.subr.mxu0 0.0
    %1626 = vmatpush1.msra.mxu0 0.0
    %1627 = vmatprep.subr.mxu0 0.0
    %1628 = vmatpush1.msra.mxu0 0.0
    %1629 = vmatprep.subr.mxu0 0.0
    %1630 = vmatpush1.msra.mxu0 0.0
    %1631 = vmatprep.subr.mxu0 0.0
    %1632 = vmatpush1.msra.mxu0 0.0
    %1633 = vmatprep.mubr.f32.mxu0 0.0
    %1634 = vmatmul.mubr.f32.gmra.mrb[0].mxu0 %v1217
    %v1635 = vpop.f32.mrb[0].mxu0
    %v1636 = vadd.f32 0.0, %v1635
    %v1637 = vpop.f32.mrb[0].mxu0
    %1638 = vdwg.mxu0
    %1639 = vmatprep.subr.mxu0 0.0
    %1640 = vmatpush1.msra.mxu0 %v49
    %1641 = vmatprep.subr.mxu0 0.0
    %1642 = vmatpush1.msra.mxu0 %v50
    %1643 = vmatprep.subr.mxu0 0.0
    %1644 = vmatpush1.msra.mxu0 0.0
    %1645 = vmatprep.subr.mxu0 0.0
    %1646 = vmatpush1.msra.mxu0 0.0
    %1647 = vmatprep.subr.mxu0 0.0
    %1648 = vmatpush1.msra.mxu0 0.0
    %1649 = vmatprep.subr.mxu0 0.0
    %1650 = vmatpush1.msra.mxu0 0.0
    %1651 = vmatprep.subr.mxu0 0.0
    %1652 = vmatpush1.msra.mxu0 0.0
    %1653 = vmatprep.subr.mxu0 0.0
    %1654 = vmatpush1.msra.mxu0 0.0
    %1655 = vmatprep.subr.mxu0 0.0
    %1656 = vmatpush1.msra.mxu0 0.0
    %1657 = vmatprep.subr.mxu0 0.0
    %1658 = vmatpush1.msra.mxu0 0.0
    %1659 = vmatprep.subr.mxu0 0.0
    %1660 = vmatpush1.msra.mxu0 0.0
    %1661 = vmatprep.subr.mxu0 0.0
    %1662 = vmatpush1.msra.mxu0 0.0
    %1663 = vmatprep.subr.mxu0 0.0
    %1664 = vmatpush1.msra.mxu0 0.0
    %1665 = vmatprep.subr.mxu0 0.0
    %1666 = vmatpush1.msra.mxu0 0.0
    %1667 = vmatprep.subr.mxu0 0.0
    %1668 = vmatpush1.msra.mxu0 0.0
    %1669 = vmatprep.subr.mxu0 0.0
    %1670 = vmatpush1.msra.mxu0 0.0
    %1671 = vmatprep.subr.mxu0 0.0
    %1672 = vmatpush1.msra.mxu0 0.0
    %1673 = vmatprep.subr.mxu0 0.0
    %1674 = vmatpush1.msra.mxu0 0.0
    %1675 = vmatprep.subr.mxu0 0.0
    %1676 = vmatpush1.msra.mxu0 0.0
    %1677 = vmatprep.subr.mxu0 0.0
    %1678 = vmatpush1.msra.mxu0 0.0
    %1679 = vmatprep.subr.mxu0 0.0
    %1680 = vmatpush1.msra.mxu0 0.0
    %1681 = vmatprep.subr.mxu0 0.0
    %1682 = vmatpush1.msra.mxu0 0.0
    %1683 = vmatprep.subr.mxu0 0.0
    %1684 = vmatpush1.msra.mxu0 0.0
    %1685 = vmatprep.subr.mxu0 0.0
    %1686 = vmatpush1.msra.mxu0 0.0
    %1687 = vmatprep.subr.mxu0 0.0
    %1688 = vmatpush1.msra.mxu0 0.0
    %1689 = vmatprep.subr.mxu0 0.0
    %1690 = vmatpush1.msra.mxu0 0.0
    %1691 = vmatprep.subr.mxu0 0.0
    %1692 = vmatpush1.msra.mxu0 0.0
    %1693 = vmatprep.subr.mxu0 0.0
    %1694 = vmatpush1.msra.mxu0 0.0
    %1695 = vmatprep.subr.mxu0 0.0
    %1696 = vmatpush1.msra.mxu0 0.0
    %1697 = vmatprep.subr.mxu0 0.0
    %1698 = vmatpush1.msra.mxu0 0.0
    %1699 = vmatprep.subr.mxu0 0.0
    %1700 = vmatpush1.msra.mxu0 0.0
    %1701 = vmatprep.subr.mxu0 0.0
    %1702 = vmatpush1.msra.mxu0 0.0
    %1703 = vmatprep.mubr.f32.mxu0 0.0
    %1704 = vmatmul.mubr.f32.gmra.mrb[0].mxu0 %v1217
    %v1705 = vpop.f32.mrb[0].mxu0
    %v1706 = vadd.f32 0.0, %v1705
    %v1707 = vpop.f32.mrb[0].mxu0
    %1708 = vdwg.mxu0
    %1709 = vmatprep.subr.mxu0 0.0
    %1710 = vmatpush1.msra.mxu0 %v51
    %1711 = vmatprep.subr.mxu0 0.0
    %1712 = vmatpush1.msra.mxu0 %v52
    %1713 = vmatprep.subr.mxu0 0.0
    %1714 = vmatpush1.msra.mxu0 0.0
    %1715 = vmatprep.subr.mxu0 0.0
    %1716 = vmatpush1.msra.mxu0 0.0
    %1717 = vmatprep.subr.mxu0 0.0
    %1718 = vmatpush1.msra.mxu0 0.0
    %1719 = vmatprep.subr.mxu0 0.0
    %1720 = vmatpush1.msra.mxu0 0.0
    %1721 = vmatprep.subr.mxu0 0.0
    %1722 = vmatpush1.msra.mxu0 0.0
    %1723 = vmatprep.subr.mxu0 0.0
    %1724 = vmatpush1.msra.mxu0 0.0
    %1725 = vmatprep.subr.mxu0 0.0
    %1726 = vmatpush1.msra.mxu0 0.0
    %1727 = vmatprep.subr.mxu0 0.0
    %1728 = vmatpush1.msra.mxu0 0.0
    %1729 = vmatprep.subr.mxu0 0.0
    %1730 = vmatpush1.msra.mxu0 0.0
    %1731 = vmatprep.subr.mxu0 0.0
    %1732 = vmatpush1.msra.mxu0 0.0
    %1733 = vmatprep.subr.mxu0 0.0
    %1734 = vmatpush1.msra.mxu0 0.0
    %1735 = vmatprep.subr.mxu0 0.0
    %1736 = vmatpush1.msra.mxu0 0.0
    %1737 = vmatprep.subr.mxu0 0.0
    %1738 = vmatpush1.msra.mxu0 0.0
    %1739 = vmatprep.subr.mxu0 0.0
    %1740 = vmatpush1.msra.mxu0 0.0
    %1741 = vmatprep.subr.mxu0 0.0
    %1742 = vmatpush1.msra.mxu0 0.0
    %1743 = vmatprep.subr.mxu0 0.0
    %1744 = vmatpush1.msra.mxu0 0.0
    %1745 = vmatprep.subr.mxu0 0.0
    %1746 = vmatpush1.msra.mxu0 0.0
    %1747 = vmatprep.subr.mxu0 0.0
    %1748 = vmatpush1.msra.mxu0 0.0
    %1749 = vmatprep.subr.mxu0 0.0
    %1750 = vmatpush1.msra.mxu0 0.0
    %1751 = vmatprep.subr.mxu0 0.0
    %1752 = vmatpush1.msra.mxu0 0.0
    %1753 = vmatprep.subr.mxu0 0.0
    %1754 = vmatpush1.msra.mxu0 0.0
    %1755 = vmatprep.subr.mxu0 0.0
    %1756 = vmatpush1.msra.mxu0 0.0
    %1757 = vmatprep.subr.mxu0 0.0
    %1758 = vmatpush1.msra.mxu0 0.0
    %1759 = vmatprep.subr.mxu0 0.0
    %1760 = vmatpush1.msra.mxu0 0.0
    %1761 = vmatprep.subr.mxu0 0.0
    %1762 = vmatpush1.msra.mxu0 0.0
    %1763 = vmatprep.subr.mxu0 0.0
    %1764 = vmatpush1.msra.mxu0 0.0
    %1765 = vmatprep.subr.mxu0 0.0
    %1766 = vmatpush1.msra.mxu0 0.0
    %1767 = vmatprep.subr.mxu0 0.0
    %1768 = vmatpush1.msra.mxu0 0.0
    %1769 = vmatprep.subr.mxu0 0.0
    %1770 = vmatpush1.msra.mxu0 0.0
    %1771 = vmatprep.subr.mxu0 0.0
    %1772 = vmatpush1.msra.mxu0 0.0
    %1773 = vmatprep.mubr.f32.mxu0 0.0
    %1774 = vmatmul.mubr.f32.gmra.mrb[0].mxu0 %v1217
    %v1775 = vpop.f32.mrb[0].mxu0
    %v1776 = vadd.f32 0.0, %v1775
    %v1777 = vpop.f32.mrb[0].mxu0
    %1778 = vdwg.mxu0
    %v1780 = vsel %vm56, %v1286, 0
    %1782 = vmatprep.subr.mxu0 0.0
    %1783 = vmatpush1.msra.mxu0 %v1214
    %1784 = vmatprep.subr.mxu0 0.0
    %1785 = vmatpush1.msra.mxu0 %v1215
    %1786 = vmatprep.subr.mxu0 0.0
    %1787 = vmatpush1.msra.mxu0 0.0
    %1788 = vmatprep.subr.mxu0 0.0
    %1789 = vmatpush1.msra.mxu0 0.0
    %1790 = vmatprep.subr.mxu0 0.0
    %1791 = vmatpush1.msra.mxu0 0.0
    %1792 = vmatprep.subr.mxu0 0.0
    %1793 = vmatpush1.msra.mxu0 0.0
    %1794 = vmatprep.subr.mxu0 0.0
    %1795 = vmatpush1.msra.mxu0 0.0
    %1796 = vmatprep.subr.mxu0 0.0
    %1797 = vmatpush1.msra.mxu0 0.0
    %1798 = vmatprep.subr.mxu0 0.0
    %1799 = vmatpush1.msra.mxu0 0.0
    %1800 = vmatprep.subr.mxu0 0.0
    %1801 = vmatpush1.msra.mxu0 0.0
    %1802 = vmatprep.subr.mxu0 0.0
    %1803 = vmatpush1.msra.mxu0 0.0
    %1804 = vmatprep.subr.mxu0 0.0
    %1805 = vmatpush1.msra.mxu0 0.0
    %1806 = vmatprep.subr.mxu0 0.0
    %1807 = vmatpush1.msra.mxu0 0.0
    %1808 = vmatprep.subr.mxu0 0.0
    %1809 = vmatpush1.msra.mxu0 0.0
    %1810 = vmatprep.subr.mxu0 0.0
    %1811 = vmatpush1.msra.mxu0 0.0
    %1812 = vmatprep.subr.mxu0 0.0
    %1813 = vmatpush1.msra.mxu0 0.0
    %1814 = vmatprep.subr.mxu0 0.0
    %1815 = vmatpush1.msra.mxu0 0.0
    %1816 = vmatprep.subr.mxu0 0.0
    %1817 = vmatpush1.msra.mxu0 0.0
    %1818 = vmatprep.subr.mxu0 0.0
    %1819 = vmatpush1.msra.mxu0 0.0
    %1820 = vmatprep.subr.mxu0 0.0
    %1821 = vmatpush1.msra.mxu0 0.0
    %1822 = vmatprep.subr.mxu0 0.0
    %1823 = vmatpush1.msra.mxu0 0.0
    %1824 = vmatprep.subr.mxu0 0.0
    %1825 = vmatpush1.msra.mxu0 0.0
    %1826 = vmatprep.subr.mxu0 0.0
    %1827 = vmatpush1.msra.mxu0 0.0
    %1828 = vmatprep.subr.mxu0 0.0
    %1829 = vmatpush1.msra.mxu0 0.0
    %1830 = vmatprep.subr.mxu0 0.0
    %1831 = vmatpush1.msra.mxu0 0.0
    %1832 = vmatprep.subr.mxu0 0.0
    %1833 = vmatpush1.msra.mxu0 0.0
    %1834 = vmatprep.subr.mxu0 0.0
    %1835 = vmatpush1.msra.mxu0 0.0
    %1836 = vmatprep.subr.mxu0 0.0
    %1837 = vmatpush1.msra.mxu0 0.0
    %1838 = vmatprep.subr.mxu0 0.0
    %1839 = vmatpush1.msra.mxu0 0.0
    %1840 = vmatprep.subr.mxu0 0.0
    %1841 = vmatpush1.msra.mxu0 0.0
    %1842 = vmatprep.subr.mxu0 0.0
    %1843 = vmatpush1.msra.mxu0 0.0
    %1844 = vmatprep.subr.mxu0 0.0
    %1845 = vmatpush1.msra.mxu0 0.0
    %1846 = vmatprep.mubr.f32.mxu0 0.0
    %1847 = vmatmul.mubr.f32.gmra.mrb[0].mxu0 %v1780
    %v1848 = vpop.f32.mrb[0].mxu0
    %v1849 = vadd.f32 0.0, %v1848
    %v1850 = vpop.f32.mrb[0].mxu0
    %1851 = vdwg.mxu0
    %v1853 = vsel %vm56, %v1356, 0
    %1855 = vmatprep.subr.mxu0 0.0
    %1856 = vmatpush1.msra.mxu0 %v1214
    %1857 = vmatprep.subr.mxu0 0.0
    %1858 = vmatpush1.msra.mxu0 %v1215
    %1859 = vmatprep.subr.mxu0 0.0
    %1860 = vmatpush1.msra.mxu0 0.0
    %1861 = vmatprep.subr.mxu0 0.0
    %1862 = vmatpush1.msra.mxu0 0.0
    %1863 = vmatprep.subr.mxu0 0.0
    %1864 = vmatpush1.msra.mxu0 0.0
    %1865 = vmatprep.subr.mxu0 0.0
    %1866 = vmatpush1.msra.mxu0 0.0
    %1867 = vmatprep.subr.mxu0 0.0
    %1868 = vmatpush1.msra.mxu0 0.0
    %1869 = vmatprep.subr.mxu0 0.0
    %1870 = vmatpush1.msra.mxu0 0.0
    %1871 = vmatprep.subr.mxu0 0.0
    %1872 = vmatpush1.msra.mxu0 0.0
    %1873 = vmatprep.subr.mxu0 0.0
    %1874 = vmatpush1.msra.mxu0 0.0
    %1875 = vmatprep.subr.mxu0 0.0
    %1876 = vmatpush1.msra.mxu0 0.0
    %1877 = vmatprep.subr.mxu0 0.0
    %1878 = vmatpush1.msra.mxu0 0.0
    %1879 = vmatprep.subr.mxu0 0.0
    %1880 = vmatpush1.msra.mxu0 0.0
    %1881 = vmatprep.subr.mxu0 0.0
    %1882 = vmatpush1.msra.mxu0 0.0
    %1883 = vmatprep.subr.mxu0 0.0
    %1884 = vmatpush1.msra.mxu0 0.0
    %1885 = vmatprep.subr.mxu0 0.0
    %1886 = vmatpush1.msra.mxu0 0.0
    %1887 = vmatprep.subr.mxu0 0.0
    %1888 = vmatpush1.msra.mxu0 0.0
    %1889 = vmatprep.subr.mxu0 0.0
    %1890 = vmatpush1.msra.mxu0 0.0
    %1891 = vmatprep.subr.mxu0 0.0
    %1892 = vmatpush1.msra.mxu0 0.0
    %1893 = vmatprep.subr.mxu0 0.0
    %1894 = vmatpush1.msra.mxu0 0.0
    %1895 = vmatprep.subr.mxu0 0.0
    %1896 = vmatpush1.msra.mxu0 0.0
    %1897 = vmatprep.subr.mxu0 0.0
    %1898 = vmatpush1.msra.mxu0 0.0
    %1899 = vmatprep.subr.mxu0 0.0
    %1900 = vmatpush1.msra.mxu0 0.0
    %1901 = vmatprep.subr.mxu0 0.0
    %1902 = vmatpush1.msra.mxu0 0.0
    %1903 = vmatprep.subr.mxu0 0.0
    %1904 = vmatpush1.msra.mxu0 0.0
    %1905 = vmatprep.subr.mxu0 0.0
    %1906 = vmatpush1.msra.mxu0 0.0
    %1907 = vmatprep.subr.mxu0 0.0
    %1908 = vmatpush1.msra.mxu0 0.0
    %1909 = vmatprep.subr.mxu0 0.0
    %1910 = vmatpush1.msra.mxu0 0.0
    %1911 = vmatprep.subr.mxu0 0.0
    %1912 = vmatpush1.msra.mxu0 0.0
    %1913 = vmatprep.subr.mxu0 0.0
    %1914 = vmatpush1.msra.mxu0 0.0
    %1915 = vmatprep.subr.mxu0 0.0
    %1916 = vmatpush1.msra.mxu0 0.0
    %1917 = vmatprep.subr.mxu0 0.0
    %1918 = vmatpush1.msra.mxu0 0.0
    %1919 = vmatprep.mubr.f32.mxu0 0.0
    %1920 = vmatmul.mubr.f32.gmra.mrb[0].mxu0 %v1853
    %v1921 = vpop.f32.mrb[0].mxu0
    %v1922 = vadd.f32 0.0, %v1921
    %v1923 = vpop.f32.mrb[0].mxu0
    %1924 = vdwg.mxu0
    %v1926 = vsel %vm56, %v1426, 0
    %1928 = vmatprep.subr.mxu0 0.0
    %1929 = vmatpush1.msra.mxu0 %v1214
    %1930 = vmatprep.subr.mxu0 0.0
    %1931 = vmatpush1.msra.mxu0 %v1215
    %1932 = vmatprep.subr.mxu0 0.0
    %1933 = vmatpush1.msra.mxu0 0.0
    %1934 = vmatprep.subr.mxu0 0.0
    %1935 = vmatpush1.msra.mxu0 0.0
    %1936 = vmatprep.subr.mxu0 0.0
    %1937 = vmatpush1.msra.mxu0 0.0
    %1938 = vmatprep.subr.mxu0 0.0
    %1939 = vmatpush1.msra.mxu0 0.0
    %1940 = vmatprep.subr.mxu0 0.0
    %1941 = vmatpush1.msra.mxu0 0.0
    %1942 = vmatprep.subr.mxu0 0.0
    %1943 = vmatpush1.msra.mxu0 0.0
    %1944 = vmatprep.subr.mxu0 0.0
    %1945 = vmatpush1.msra.mxu0 0.0
    %1946 = vmatprep.subr.mxu0 0.0
    %1947 = vmatpush1.msra.mxu0 0.0
    %1948 = vmatprep.subr.mxu0 0.0
    %1949 = vmatpush1.msra.mxu0 0.0
    %1950 = vmatprep.subr.mxu0 0.0
    %1951 = vmatpush1.msra.mxu0 0.0
    %1952 = vmatprep.subr.mxu0 0.0
    %1953 = vmatpush1.msra.mxu0 0.0
    %1954 = vmatprep.subr.mxu0 0.0
    %1955 = vmatpush1.msra.mxu0 0.0
    %1956 = vmatprep.subr.mxu0 0.0
    %1957 = vmatpush1.msra.mxu0 0.0
    %1958 = vmatprep.subr.mxu0 0.0
    %1959 = vmatpush1.msra.mxu0 0.0
    %1960 = vmatprep.subr.mxu0 0.0
    %1961 = vmatpush1.msra.mxu0 0.0
    %1962 = vmatprep.subr.mxu0 0.0
    %1963 = vmatpush1.msra.mxu0 0.0
    %1964 = vmatprep.subr.mxu0 0.0
    %1965 = vmatpush1.msra.mxu0 0.0
    %1966 = vmatprep.subr.mxu0 0.0
    %1967 = vmatpush1.msra.mxu0 0.0
    %1968 = vmatprep.subr.mxu0 0.0
    %1969 = vmatpush1.msra.mxu0 0.0
    %1970 = vmatprep.subr.mxu0 0.0
    %1971 = vmatpush1.msra.mxu0 0.0
    %1972 = vmatprep.subr.mxu0 0.0
    %1973 = vmatpush1.msra.mxu0 0.0
    %1974 = vmatprep.subr.mxu0 0.0
    %1975 = vmatpush1.msra.mxu0 0.0
    %1976 = vmatprep.subr.mxu0 0.0
    %1977 = vmatpush1.msra.mxu0 0.0
    %1978 = vmatprep.subr.mxu0 0.0
    %1979 = vmatpush1.msra.mxu0 0.0
    %1980 = vmatprep.subr.mxu0 0.0
    %1981 = vmatpush1.msra.mxu0 0.0
    %1982 = vmatprep.subr.mxu0 0.0
    %1983 = vmatpush1.msra.mxu0 0.0
    %1984 = vmatprep.subr.mxu0 0.0
    %1985 = vmatpush1.msra.mxu0 0.0
    %1986 = vmatprep.subr.mxu0 0.0
    %1987 = vmatpush1.msra.mxu0 0.0
    %1988 = vmatprep.subr.mxu0 0.0
    %1989 = vmatpush1.msra.mxu0 0.0
    %1990 = vmatprep.subr.mxu0 0.0
    %1991 = vmatpush1.msra.mxu0 0.0
    %1992 = vmatprep.mubr.f32.mxu0 0.0
    %1993 = vmatmul.mubr.f32.gmra.mrb[0].mxu0 %v1926
    %v1994 = vpop.f32.mrb[0].mxu0
    %v1995 = vadd.f32 0.0, %v1994
    %v1996 = vpop.f32.mrb[0].mxu0
    %1997 = vdwg.mxu0
    %v1999 = vsel %vm56, %v1496, 0
    %2001 = vmatprep.subr.mxu0 0.0
    %2002 = vmatpush1.msra.mxu0 %v1214
    %2003 = vmatprep.subr.mxu0 0.0
    %2004 = vmatpush1.msra.mxu0 %v1215
    %2005 = vmatprep.subr.mxu0 0.0
    %2006 = vmatpush1.msra.mxu0 0.0
    %2007 = vmatprep.subr.mxu0 0.0
    %2008 = vmatpush1.msra.mxu0 0.0
    %2009 = vmatprep.subr.mxu0 0.0
    %2010 = vmatpush1.msra.mxu0 0.0
    %2011 = vmatprep.subr.mxu0 0.0
    %2012 = vmatpush1.msra.mxu0 0.0
    %2013 = vmatprep.subr.mxu0 0.0
    %2014 = vmatpush1.msra.mxu0 0.0
    %2015 = vmatprep.subr.mxu0 0.0
    %2016 = vmatpush1.msra.mxu0 0.0
    %2017 = vmatprep.subr.mxu0 0.0
    %2018 = vmatpush1.msra.mxu0 0.0
    %2019 = vmatprep.subr.mxu0 0.0
    %2020 = vmatpush1.msra.mxu0 0.0
    %2021 = vmatprep.subr.mxu0 0.0
    %2022 = vmatpush1.msra.mxu0 0.0
    %2023 = vmatprep.subr.mxu0 0.0
    %2024 = vmatpush1.msra.mxu0 0.0
    %2025 = vmatprep.subr.mxu0 0.0
    %2026 = vmatpush1.msra.mxu0 0.0
    %2027 = vmatprep.subr.mxu0 0.0
    %2028 = vmatpush1.msra.mxu0 0.0
    %2029 = vmatprep.subr.mxu0 0.0
    %2030 = vmatpush1.msra.mxu0 0.0
    %2031 = vmatprep.subr.mxu0 0.0
    %2032 = vmatpush1.msra.mxu0 0.0
    %2033 = vmatprep.subr.mxu0 0.0
    %2034 = vmatpush1.msra.mxu0 0.0
    %2035 = vmatprep.subr.mxu0 0.0
    %2036 = vmatpush1.msra.mxu0 0.0
    %2037 = vmatprep.subr.mxu0 0.0
    %2038 = vmatpush1.msra.mxu0 0.0
    %2039 = vmatprep.subr.mxu0 0.0
    %2040 = vmatpush1.msra.mxu0 0.0
    %2041 = vmatprep.subr.mxu0 0.0
    %2042 = vmatpush1.msra.mxu0 0.0
    %2043 = vmatprep.subr.mxu0 0.0
    %2044 = vmatpush1.msra.mxu0 0.0
    %2045 = vmatprep.subr.mxu0 0.0
    %2046 = vmatpush1.msra.mxu0 0.0
    %2047 = vmatprep.subr.mxu0 0.0
    %2048 = vmatpush1.msra.mxu0 0.0
    %2049 = vmatprep.subr.mxu0 0.0
    %2050 = vmatpush1.msra.mxu0 0.0
    %2051 = vmatprep.subr.mxu0 0.0
    %2052 = vmatpush1.msra.mxu0 0.0
    %2053 = vmatprep.subr.mxu0 0.0
    %2054 = vmatpush1.msra.mxu0 0.0
    %2055 = vmatprep.subr.mxu0 0.0
    %2056 = vmatpush1.msra.mxu0 0.0
    %2057 = vmatprep.subr.mxu0 0.0
    %2058 = vmatpush1.msra.mxu0 0.0
    %2059 = vmatprep.subr.mxu0 0.0
    %2060 = vmatpush1.msra.mxu0 0.0
    %2061 = vmatprep.subr.mxu0 0.0
    %2062 = vmatpush1.msra.mxu0 0.0
    %2063 = vmatprep.subr.mxu0 0.0
    %2064 = vmatpush1.msra.mxu0 0.0
    %2065 = vmatprep.mubr.f32.mxu0 0.0
    %2066 = vmatmul.mubr.f32.gmra.mrb[0].mxu0 %v1999
    %v2067 = vpop.f32.mrb[0].mxu0
    %v2068 = vadd.f32 0.0, %v2067
    %v2069 = vpop.f32.mrb[0].mxu0
    %2070 = vdwg.mxu0
    %v2072 = vsel %vm56, %v1566, 0
    %2074 = vmatprep.subr.mxu0 0.0
    %2075 = vmatpush1.msra.mxu0 %v1214
    %2076 = vmatprep.subr.mxu0 0.0
    %2077 = vmatpush1.msra.mxu0 %v1215
    %2078 = vmatprep.subr.mxu0 0.0
    %2079 = vmatpush1.msra.mxu0 0.0
    %2080 = vmatprep.subr.mxu0 0.0
    %2081 = vmatpush1.msra.mxu0 0.0
    %2082 = vmatprep.subr.mxu0 0.0
    %2083 = vmatpush1.msra.mxu0 0.0
    %2084 = vmatprep.subr.mxu0 0.0
    %2085 = vmatpush1.msra.mxu0 0.0
    %2086 = vmatprep.subr.mxu0 0.0
    %2087 = vmatpush1.msra.mxu0 0.0
    %2088 = vmatprep.subr.mxu0 0.0
    %2089 = vmatpush1.msra.mxu0 0.0
    %2090 = vmatprep.subr.mxu0 0.0
    %2091 = vmatpush1.msra.mxu0 0.0
    %2092 = vmatprep.subr.mxu0 0.0
    %2093 = vmatpush1.msra.mxu0 0.0
    %2094 = vmatprep.subr.mxu0 0.0
    %2095 = vmatpush1.msra.mxu0 0.0
    %2096 = vmatprep.subr.mxu0 0.0
    %2097 = vmatpush1.msra.mxu0 0.0
    %2098 = vmatprep.subr.mxu0 0.0
    %2099 = vmatpush1.msra.mxu0 0.0
    %2100 = vmatprep.subr.mxu0 0.0
    %2101 = vmatpush1.msra.mxu0 0.0
    %2102 = vmatprep.subr.mxu0 0.0
    %2103 = vmatpush1.msra.mxu0 0.0
    %2104 = vmatprep.subr.mxu0 0.0
    %2105 = vmatpush1.msra.mxu0 0.0
    %2106 = vmatprep.subr.mxu0 0.0
    %2107 = vmatpush1.msra.mxu0 0.0
    %2108 = vmatprep.subr.mxu0 0.0
    %2109 = vmatpush1.msra.mxu0 0.0
    %2110 = vmatprep.subr.mxu0 0.0
    %2111 = vmatpush1.msra.mxu0 0.0
    %2112 = vmatprep.subr.mxu0 0.0
    %2113 = vmatpush1.msra.mxu0 0.0
    %2114 = vmatprep.subr.mxu0 0.0
    %2115 = vmatpush1.msra.mxu0 0.0
    %2116 = vmatprep.subr.mxu0 0.0
    %2117 = vmatpush1.msra.mxu0 0.0
    %2118 = vmatprep.subr.mxu0 0.0
    %2119 = vmatpush1.msra.mxu0 0.0
    %2120 = vmatprep.subr.mxu0 0.0
    %2121 = vmatpush1.msra.mxu0 0.0
    %2122 = vmatprep.subr.mxu0 0.0
    %2123 = vmatpush1.msra.mxu0 0.0
    %2124 = vmatprep.subr.mxu0 0.0
    %2125 = vmatpush1.msra.mxu0 0.0
    %2126 = vmatprep.subr.mxu0 0.0
    %2127 = vmatpush1.msra.mxu0 0.0
    %2128 = vmatprep.subr.mxu0 0.0
    %2129 = vmatpush1.msra.mxu0 0.0
    %2130 = vmatprep.subr.mxu0 0.0
    %2131 = vmatpush1.msra.mxu0 0.0
    %2132 = vmatprep.subr.mxu0 0.0
    %2133 = vmatpush1.msra.mxu0 0.0
    %2134 = vmatprep.subr.mxu0 0.0
    %2135 = vmatpush1.msra.mxu0 0.0
    %2136 = vmatprep.subr.mxu0 0.0
    %2137 = vmatpush1.msra.mxu0 0.0
    %2138 = vmatprep.mubr.f32.mxu0 0.0
    %2139 = vmatmul.mubr.f32.gmra.mrb[0].mxu0 %v2072
    %v2140 = vpop.f32.mrb[0].mxu0
    %v2141 = vadd.f32 0.0, %v2140
    %v2142 = vpop.f32.mrb[0].mxu0
    %2143 = vdwg.mxu0
    %v2145 = vsel %vm56, %v1636, 0
    %2147 = vmatprep.subr.mxu0 0.0
    %2148 = vmatpush1.msra.mxu0 %v1214
    %2149 = vmatprep.subr.mxu0 0.0
    %2150 = vmatpush1.msra.mxu0 %v1215
    %2151 = vmatprep.subr.mxu0 0.0
    %2152 = vmatpush1.msra.mxu0 0.0
    %2153 = vmatprep.subr.mxu0 0.0
    %2154 = vmatpush1.msra.mxu0 0.0
    %2155 = vmatprep.subr.mxu0 0.0
    %2156 = vmatpush1.msra.mxu0 0.0
    %2157 = vmatprep.subr.mxu0 0.0
    %2158 = vmatpush1.msra.mxu0 0.0
    %2159 = vmatprep.subr.mxu0 0.0
    %2160 = vmatpush1.msra.mxu0 0.0
    %2161 = vmatprep.subr.mxu0 0.0
    %2162 = vmatpush1.msra.mxu0 0.0
    %2163 = vmatprep.subr.mxu0 0.0
    %2164 = vmatpush1.msra.mxu0 0.0
    %2165 = vmatprep.subr.mxu0 0.0
    %2166 = vmatpush1.msra.mxu0 0.0
    %2167 = vmatprep.subr.mxu0 0.0
    %2168 = vmatpush1.msra.mxu0 0.0
    %2169 = vmatprep.subr.mxu0 0.0
    %2170 = vmatpush1.msra.mxu0 0.0
    %2171 = vmatprep.subr.mxu0 0.0
    %2172 = vmatpush1.msra.mxu0 0.0
    %2173 = vmatprep.subr.mxu0 0.0
    %2174 = vmatpush1.msra.mxu0 0.0
    %2175 = vmatprep.subr.mxu0 0.0
    %2176 = vmatpush1.msra.mxu0 0.0
    %2177 = vmatprep.subr.mxu0 0.0
    %2178 = vmatpush1.msra.mxu0 0.0
    %2179 = vmatprep.subr.mxu0 0.0
    %2180 = vmatpush1.msra.mxu0 0.0
    %2181 = vmatprep.subr.mxu0 0.0
    %2182 = vmatpush1.msra.mxu0 0.0
    %2183 = vmatprep.subr.mxu0 0.0
    %2184 = vmatpush1.msra.mxu0 0.0
    %2185 = vmatprep.subr.mxu0 0.0
    %2186 = vmatpush1.msra.mxu0 0.0
    %2187 = vmatprep.subr.mxu0 0.0
    %2188 = vmatpush1.msra.mxu0 0.0
    %2189 = vmatprep.subr.mxu0 0.0
    %2190 = vmatpush1.msra.mxu0 0.0
    %2191 = vmatprep.subr.mxu0 0.0
    %2192 = vmatpush1.msra.mxu0 0.0
    %2193 = vmatprep.subr.mxu0 0.0
    %2194 = vmatpush1.msra.mxu0 0.0
    %2195 = vmatprep.subr.mxu0 0.0
    %2196 = vmatpush1.msra.mxu0 0.0
    %2197 = vmatprep.subr.mxu0 0.0
    %2198 = vmatpush1.msra.mxu0 0.0
    %2199 = vmatprep.subr.mxu0 0.0
    %2200 = vmatpush1.msra.mxu0 0.0
    %2201 = vmatprep.subr.mxu0 0.0
    %2202 = vmatpush1.msra.mxu0 0.0
    %2203 = vmatprep.subr.mxu0 0.0
    %2204 = vmatpush1.msra.mxu0 0.0
    %2205 = vmatprep.subr.mxu0 0.0
    %2206 = vmatpush1.msra.mxu0 0.0
    %2207 = vmatprep.subr.mxu0 0.0
    %2208 = vmatpush1.msra.mxu0 0.0
    %2209 = vmatprep.subr.mxu0 0.0
    %2210 = vmatpush1.msra.mxu0 0.0
    %2211 = vmatprep.mubr.f32.mxu0 0.0
    %2212 = vmatmul.mubr.f32.gmra.mrb[0].mxu0 %v2145
    %v2213 = vpop.f32.mrb[0].mxu0
    %v2214 = vadd.f32 0.0, %v2213
    %v2215 = vpop.f32.mrb[0].mxu0
    %2216 = vdwg.mxu0
    %v2218 = vsel %vm56, %v1706, 0
    %2220 = vmatprep.subr.mxu0 0.0
    %2221 = vmatpush1.msra.mxu0 %v1214
    %2222 = vmatprep.subr.mxu0 0.0
    %2223 = vmatpush1.msra.mxu0 %v1215
    %2224 = vmatprep.subr.mxu0 0.0
    %2225 = vmatpush1.msra.mxu0 0.0
    %2226 = vmatprep.subr.mxu0 0.0
    %2227 = vmatpush1.msra.mxu0 0.0
    %2228 = vmatprep.subr.mxu0 0.0
    %2229 = vmatpush1.msra.mxu0 0.0
    %2230 = vmatprep.subr.mxu0 0.0
    %2231 = vmatpush1.msra.mxu0 0.0
    %2232 = vmatprep.subr.mxu0 0.0
    %2233 = vmatpush1.msra.mxu0 0.0
    %2234 = vmatprep.subr.mxu0 0.0
    %2235 = vmatpush1.msra.mxu0 0.0
    %2236 = vmatprep.subr.mxu0 0.0
    %2237 = vmatpush1.msra.mxu0 0.0
    %2238 = vmatprep.subr.mxu0 0.0
    %2239 = vmatpush1.msra.mxu0 0.0
    %2240 = vmatprep.subr.mxu0 0.0
    %2241 = vmatpush1.msra.mxu0 0.0
    %2242 = vmatprep.subr.mxu0 0.0
    %2243 = vmatpush1.msra.mxu0 0.0
    %2244 = vmatprep.subr.mxu0 0.0
    %2245 = vmatpush1.msra.mxu0 0.0
    %2246 = vmatprep.subr.mxu0 0.0
    %2247 = vmatpush1.msra.mxu0 0.0
    %2248 = vmatprep.subr.mxu0 0.0
    %2249 = vmatpush1.msra.mxu0 0.0
    %2250 = vmatprep.subr.mxu0 0.0
    %2251 = vmatpush1.msra.mxu0 0.0
    %2252 = vmatprep.subr.mxu0 0.0
    %2253 = vmatpush1.msra.mxu0 0.0
    %2254 = vmatprep.subr.mxu0 0.0
    %2255 = vmatpush1.msra.mxu0 0.0
    %2256 = vmatprep.subr.mxu0 0.0
    %2257 = vmatpush1.msra.mxu0 0.0
    %2258 = vmatprep.subr.mxu0 0.0
    %2259 = vmatpush1.msra.mxu0 0.0
    %2260 = vmatprep.subr.mxu0 0.0
    %2261 = vmatpush1.msra.mxu0 0.0
    %2262 = vmatprep.subr.mxu0 0.0
    %2263 = vmatpush1.msra.mxu0 0.0
    %2264 = vmatprep.subr.mxu0 0.0
    %2265 = vmatpush1.msra.mxu0 0.0
    %2266 = vmatprep.subr.mxu0 0.0
    %2267 = vmatpush1.msra.mxu0 0.0
    %2268 = vmatprep.subr.mxu0 0.0
    %2269 = vmatpush1.msra.mxu0 0.0
    %2270 = vmatprep.subr.mxu0 0.0
    %2271 = vmatpush1.msra.mxu0 0.0
    %2272 = vmatprep.subr.mxu0 0.0
    %2273 = vmatpush1.msra.mxu0 0.0
    %2274 = vmatprep.subr.mxu0 0.0
    %2275 = vmatpush1.msra.mxu0 0.0
    %2276 = vmatprep.subr.mxu0 0.0
    %2277 = vmatpush1.msra.mxu0 0.0
    %2278 = vmatprep.subr.mxu0 0.0
    %2279 = vmatpush1.msra.mxu0 0.0
    %2280 = vmatprep.subr.mxu0 0.0
    %2281 = vmatpush1.msra.mxu0 0.0
    %2282 = vmatprep.subr.mxu0 0.0
    %2283 = vmatpush1.msra.mxu0 0.0
    %2284 = vmatprep.mubr.f32.mxu0 0.0
    %2285 = vmatmul.mubr.f32.gmra.mrb[0].mxu0 %v2218
    %v2286 = vpop.f32.mrb[0].mxu0
    %v2287 = vadd.f32 0.0, %v2286
    %v2288 = vpop.f32.mrb[0].mxu0
    %2289 = vdwg.mxu0
    %v2291 = vsel %vm56, %v1776, 0
    %2293 = vmatprep.subr.mxu0 0.0
    %2294 = vmatpush1.msra.mxu0 %v1214
    %2295 = vmatprep.subr.mxu0 0.0
    %2296 = vmatpush1.msra.mxu0 %v1215
    %2297 = vmatprep.subr.mxu0 0.0
    %2298 = vmatpush1.msra.mxu0 0.0
    %2299 = vmatprep.subr.mxu0 0.0
    %2300 = vmatpush1.msra.mxu0 0.0
    %2301 = vmatprep.subr.mxu0 0.0
    %2302 = vmatpush1.msra.mxu0 0.0
    %2303 = vmatprep.subr.mxu0 0.0
    %2304 = vmatpush1.msra.mxu0 0.0
    %2305 = vmatprep.subr.mxu0 0.0
    %2306 = vmatpush1.msra.mxu0 0.0
    %2307 = vmatprep.subr.mxu0 0.0
    %2308 = vmatpush1.msra.mxu0 0.0
    %2309 = vmatprep.subr.mxu0 0.0
    %2310 = vmatpush1.msra.mxu0 0.0
    %2311 = vmatprep.subr.mxu0 0.0
    %2312 = vmatpush1.msra.mxu0 0.0
    %2313 = vmatprep.subr.mxu0 0.0
    %2314 = vmatpush1.msra.mxu0 0.0
    %2315 = vmatprep.subr.mxu0 0.0
    %2316 = vmatpush1.msra.mxu0 0.0
    %2317 = vmatprep.subr.mxu0 0.0
    %2318 = vmatpush1.msra.mxu0 0.0
    %2319 = vmatprep.subr.mxu0 0.0
    %2320 = vmatpush1.msra.mxu0 0.0
    %2321 = vmatprep.subr.mxu0 0.0
    %2322 = vmatpush1.msra.mxu0 0.0
    %2323 = vmatprep.subr.mxu0 0.0
    %2324 = vmatpush1.msra.mxu0 0.0
    %2325 = vmatprep.subr.mxu0 0.0
    %2326 = vmatpush1.msra.mxu0 0.0
    %2327 = vmatprep.subr.mxu0 0.0
    %2328 = vmatpush1.msra.mxu0 0.0
    %2329 = vmatprep.subr.mxu0 0.0
    %2330 = vmatpush1.msra.mxu0 0.0
    %2331 = vmatprep.subr.mxu0 0.0
    %2332 = vmatpush1.msra.mxu0 0.0
    %2333 = vmatprep.subr.mxu0 0.0
    %2334 = vmatpush1.msra.mxu0 0.0
    %2335 = vmatprep.subr.mxu0 0.0
    %2336 = vmatpush1.msra.mxu0 0.0
    %2337 = vmatprep.subr.mxu0 0.0
    %2338 = vmatpush1.msra.mxu0 0.0
    %2339 = vmatprep.subr.mxu0 0.0
    %2340 = vmatpush1.msra.mxu0 0.0
    %2341 = vmatprep.subr.mxu0 0.0
    %2342 = vmatpush1.msra.mxu0 0.0
    %2343 = vmatprep.subr.mxu0 0.0
    %2344 = vmatpush1.msra.mxu0 0.0
    %2345 = vmatprep.subr.mxu0 0.0
    %2346 = vmatpush1.msra.mxu0 0.0
    %2347 = vmatprep.subr.mxu0 0.0
    %2348 = vmatpush1.msra.mxu0 0.0
    %2349 = vmatprep.subr.mxu0 0.0
    %2350 = vmatpush1.msra.mxu0 0.0
    %2351 = vmatprep.subr.mxu0 0.0
    %2352 = vmatpush1.msra.mxu0 0.0
    %2353 = vmatprep.subr.mxu0 0.0
    %2354 = vmatpush1.msra.mxu0 0.0
    %2355 = vmatprep.subr.mxu0 0.0
    %2356 = vmatpush1.msra.mxu0 0.0
    %2357 = vmatprep.mubr.f32.mxu0 0.0
    %2358 = vmatmul.mubr.f32.gmra.mrb[0].mxu0 %v2291
    %v2359 = vpop.f32.mrb[0].mxu0
    %v2360 = vadd.f32 0.0, %v2359
    %v2361 = vpop.f32.mrb[0].mxu0
    %2362 = vdwg.mxu0
    %vm2363 = vcmask 27648
    %2364 = vst.msk [vmem:[%s6] sm:$0xf] %vm2363, %v1849
    %2365 = vst.msk [vmem:[%s6 + $0x4] sm:$0xf] %vm2363, %v1922
    %2366 = vst.msk [vmem:[%s6 + $0x8] sm:$0xf] %vm2363, %v1995
    %2367 = vst.msk [vmem:[%s6 + $0xc] sm:$0xf] %vm2363, %v2068
    %2368 = vst.msk [vmem:[%s6 + $0x10] sm:$0xf] %vm2363, %v2141
    %2369 = vst.msk [vmem:[%s6 + $0x14] sm:$0xf] %vm2363, %v2214
    %2370 = vst.msk [vmem:[%s6 + $0x18] sm:$0xf] %vm2363, %v2287
    %2371 = vst.msk [vmem:[%s6 + $0x1c] sm:$0xf] %vm2363, %v2360
    // Predicated region
    $region26: #{tpu_custom_call.1} parent=1 // pred_check
      _
    $region27: #{tpu_custom_call.1} parent=1 // pred_check_branch
      %2373 = sbr.rel (0) target = $region29
    $region28: #{tpu_custom_call.1} parent=1 // pred_region
      %s2375 = ssub.s32 1024, 1024
      %2376 = vsyncadd [#allocation4], %s2375
      %s2377 = sshll.u32 [#allocation5], 4
      %s2378 = int_to_ptr.vmem [resolvable:$true] %s2377
      %2383 = dma.vmem_to_hbm [thread:$0]  %s2378, 1024, %s5, [#allocation4], 128, 128, 8
    $region29: #{tpu_custom_call.1} parent=1 // pred_fallthru
      _
    // Predicated region
    $region30: #{tpu_custom_call.1} parent=1 // pred_check
      _
    $region31: #{tpu_custom_call.1} parent=1 // pred_check_branch
      %2385 = sbr.rel (0) target = $region33
    $region32: #{tpu_custom_call.1} parent=1 // pred_region
      _
    $region33: #{tpu_custom_call.1} parent=1 // pred_fallthru
      _
    // Predicated region
    $region34: #{tpu_custom_call.1} parent=1 // pred_check
      _
    $region35: #{tpu_custom_call.1} parent=1 // pred_check_branch
      %2387 = sbr.rel (0) target = $region37
    $region36: #{tpu_custom_call.1} parent=1 // pred_region
      %2388 = dma.done [#allocation4], 1024
    $region37: #{tpu_custom_call.1} parent=1 // pred_fallthru
      _
    // Predicated region
    $region38: #{tpu_custom_call.1} parent=1 // pred_check
      _
    $region39: #{tpu_custom_call.1} parent=1 // pred_check_branch
      %2390 = sbr.rel (0) target = $region41
    $region40: #{tpu_custom_call.1} parent=1 // pred_region
      _
    $region41: #{tpu_custom_call.1} parent=1 // pred_fallthru
      _
    %2391 = vsyncpa [#allocation3], 1
    %2392 = vsyncpa [#allocation4], 1

</llo_original>
